<compile_context>
chip_gen: v5e
topology: v5e:2x2
jax: 0.10.0
libtpu: 0.0.40
codegen_flags: <defaults>
</compile_context>

<pallas_src>
import jax
import jax.numpy as jnp
from jax import lax
from jax.experimental import pallas as pl
from jax.experimental.pallas import tpu as pltpu

# ----------------------------------------------------------------------------
# Small, forward-consistent hyper-parameters
# (original defaults: input_dim=2150, hidden_channels=64, output_dim=args.raca_odim)
# ----------------------------------------------------------------------------
BATCH = 4
INPUT_DIM = 256          # spectral length L (divisible by 8)
HIDDEN = 16              # hidden_channels
OUTPUT_DIM = 32          # output_dim (stand-in for args.raca_odim)
KSIZE = 5
STRIDE = 2
PAD = 2
T1 = INPUT_DIM // 2
T2 = INPUT_DIM // 4
T3 = INPUT_DIM // 8      # length after the three stride-2 convs
O_PAD = ((OUTPUT_DIM + 127) // 128) * 128   # lane-dense fc output width

# Padded activation segments: data rows start at DATA_OFF (8-aligned stores);
# segment length keeps every batch segment sublane-tile aligned.
DATA_OFF = 8
S2 = T1 + 2 * DATA_OFF   # padded conv2 input segment rows per batch
S3 = T2 + 2 * DATA_OFF   # padded conv3 input segment rows per batch


def _stage_padded(pad_ref, seg, t_in, get_chunk):
    """Write each sample's rows at DATA_OFF and zero ONLY the pad rows read.

    Tap k of output position t reads padded row base + DATA_OFF - PAD + 2t + k,
    so the rows that must be zero are [DATA_OFF-PAD, DATA_OFF) and
    [DATA_OFF + t_in, DATA_OFF + t_in + PAD) (offset t_in is read by the k=4
    tap at the last output position).  Everything else is never touched.
    """
    zeros = jnp.zeros((PAD, pad_ref.shape[-1]), pad_ref.dtype)
    for b in range(BATCH):
        base = b * seg
        pad_ref[pl.ds(base + DATA_OFF - PAD, PAD), :] = zeros
        pad_ref[pl.ds(base + DATA_OFF + t_in, PAD), :] = zeros
        pad_ref[pl.ds(base + DATA_OFF, t_in), :] = get_chunk(b)   # 8-aligned


def _conv_relu(pad_ref, seg, t_out, w_ref, b_ref):
    """Conv1d(kernel=5, stride=2, pad=2) + ReLU as one im2col matmul.

    pad_ref: (BATCH*seg, C_in) zero-padded input (data rows at DATA_OFF).
    w_ref:   (KSIZE*C_in, C_out), row index k*C_in + c.
    returns  (BATCH*t_out, C_out) with rows ordered (batch, time).
    """
    taps = []
    for k in range(KSIZE):
        rows = [pad_ref[pl.ds(b * seg + DATA_OFF - PAD + k, t_out, stride=STRIDE), :]
                for b in range(BATCH)]
        taps.append(jnp.concatenate(rows, axis=0))             # (B*t_out, C_in)
    col = jnp.concatenate(taps, axis=1)                         # (B*t_out, K*C_in)
    y = jnp.dot(col, w_ref[...], preferred_element_type=jnp.float32)
    return jnp.maximum(y + b_ref[...], 0.0)


def _conv_stack_kernel(col1_ref, w1_ref, b1_ref, w2_ref, b2_ref, w3_ref, b3_ref,
                       h3_ref, pad2, pad3):
    """conv1+conv2+conv3 (+ReLU each), single grid step, whole batch."""
    # ---- conv1: wrapper-built im2col (B*T1, K) -> (B*T1, H), one matmul ----
    h1 = jnp.maximum(
        jnp.dot(col1_ref[...], w1_ref[...], preferred_element_type=jnp.float32)
        + b1_ref[...], 0.0)

    # ---- conv2: (B*T1, H) -> (B*T2, H) ----
    _stage_padded(pad2, S2, T1, lambda b: h1[b * T1:(b + 1) * T1, :])
    h2 = _conv_relu(pad2, S2, T2, w2_ref, b2_ref)

    # ---- conv3: (B*T2, H) -> (B*T3, H), rows = (batch-major, time-inner) ----
    _stage_padded(pad3, S3, T2, lambda b: h2[b * T2:(b + 1) * T2, :])
    h3_ref[...] = _conv_relu(pad3, S3, T3, w3_ref, b3_ref)


def _fc_kernel(flat_ref, wfc_ref, bfc_ref, out_ref):
    """fc: (B, T3*H) @ (T3*H, O_PAD) + bias; all operands lane-dense."""
    out_ref[...] = (jnp.dot(flat_ref[...], wfc_ref[...],
                            preferred_element_type=jnp.float32)
                    + bfc_ref[...])


@jax.jit
def conv1d_encoder(x, params):
    """x: (BATCH, INPUT_DIM) f32 -> (BATCH, OUTPUT_DIM) f32, matching torch forward."""
    assert x.shape == (BATCH, INPUT_DIM)
    w1, b1, w2, b2, w3, b3, wfc, bfc = params

    # ---------------- wrapper-side layout plumbing (free under XLA) ----------
    # conv weights (C_out, C_in, K) -> (K*C_in, C_out), row index k*C_in + c
    w1_r = jnp.transpose(w1, (2, 1, 0)).reshape(KSIZE * 1, HIDDEN)
    w2_r = jnp.transpose(w2, (2, 1, 0)).reshape(KSIZE * HIDDEN, HIDDEN)
    w3_r = jnp.transpose(w3, (2, 1, 0)).reshape(KSIZE * HIDDEN, HIDDEN)
    b1_r = b1.reshape(1, HIDDEN)
    b2_r = b2.reshape(1, HIDDEN)
    b3_r = b3.reshape(1, HIDDEN)

    # conv1 im2col built here (no FLOPs): col1[b*T1 + t, k] = xpad[b, 2t + k]
    xp = jnp.pad(x, ((0, 0), (PAD, PAD)))
    tap_idx = STRIDE * jnp.arange(T1)[:, None] + jnp.arange(KSIZE)[None, :]
    col1 = xp[:, tap_idx].reshape(BATCH * T1, KSIZE)

    # fc weight: torch flat column index c*T3 + t -> row index t*H + c, lane-padded
    wfc_r = wfc.reshape(OUTPUT_DIM, HIDDEN, T3).transpose(2, 1, 0)
    wfc_r = wfc_r.reshape(T3 * HIDDEN, OUTPUT_DIM)
    wfc_r = jnp.pad(wfc_r, ((0, 0), (0, O_PAD - OUTPUT_DIM)))
    bfc_r = jnp.pad(bfc.reshape(1, OUTPUT_DIM), ((0, 0), (0, O_PAD - OUTPUT_DIM)))

    # ---------------- kernel 1: the three convs (single step) ----------------
    h3 = pl.pallas_call(
        _conv_stack_kernel,
        out_shape=jax.ShapeDtypeStruct((BATCH * T3, HIDDEN), jnp.float32),
        scratch_shapes=[
            pltpu.VMEM((BATCH * S2, HIDDEN), jnp.float32),   # padded conv2 input
            pltpu.VMEM((BATCH * S3, HIDDEN), jnp.float32),   # padded conv3 input
        ],
    )(col1, w1_r, b1_r, w2_r, b2_r, w3_r, b3_r)

    # Row-major (B*T3, H) -> (B, T3*H) is a no-op reshape on the HBM buffer
    # (flat[b, t*H + c] = h3[b*T3 + t, c]); the fc kernel's input DMA re-tiles
    # it lane-dense, so the flatten costs only an 8 KiB round-trip.
    flat = h3.reshape(BATCH, T3 * HIDDEN)

    # ---------------- kernel 2: the fc (single step, lane-dense) -------------
    out = pl.pallas_call(
        _fc_kernel,
        out_shape=jax.ShapeDtypeStruct((BATCH, O_PAD), jnp.float32),
    )(flat, wfc_r, bfc_r)
    return out[:, :OUTPUT_DIM]


def conv1d_encoder_reference(x, params):
    """Pure-JAX reference reproducing the PyTorch forward exactly."""
    w1, b1, w2, b2, w3, b3, wfc, bfc = params
    h = x[:, None, :]                                                 # (B, 1, L)
    for w, b in ((w1, b1), (w2, b2), (w3, b3)):
        h = lax.conv_general_dilated(
            h, w, window_strides=(STRIDE,), padding=((PAD, PAD),),
            dimension_numbers=("NCH", "OIH", "NCH"),
            precision=lax.Precision.HIGHEST)
        h = jnp.maximum(h + b[None, :, None], 0.0)
    flat = h.reshape(x.shape[0], -1)                                  # (B, C*T3)
    return jnp.dot(flat, wfc.T, precision=lax.Precision.HIGHEST) + bfc[None, :]


def init_params(key):
    """Deterministic synthetic parameters with the module's shapes."""
    ks = jax.random.split(key, 8)
    w1 = 0.2 * jax.random.normal(ks[0], (HIDDEN, 1, KSIZE), jnp.float32)
    b1 = 0.1 * jax.random.normal(ks[1], (HIDDEN,), jnp.float32)
    w2 = 0.1 * jax.random.normal(ks[2], (HIDDEN, HIDDEN, KSIZE), jnp.float32)
    b2 = 0.1 * jax.random.normal(ks[3], (HIDDEN,), jnp.float32)
    w3 = 0.1 * jax.random.normal(ks[4], (HIDDEN, HIDDEN, KSIZE), jnp.float32)
    b3 = 0.1 * jax.random.normal(ks[5], (HIDDEN,), jnp.float32)
    wfc = 0.05 * jax.random.normal(ks[6], (OUTPUT_DIM, HIDDEN * T3), jnp.float32)
    bfc = 0.05 * jax.random.normal(ks[7], (OUTPUT_DIM,), jnp.float32)
    return (w1, b1, w2, b2, w3, b3, wfc, bfc)


if __name__ == "__main__":
    key = jax.random.PRNGKey(0)
    kx, kp = jax.random.split(key)
    x = jax.random.normal(kx, (BATCH, INPUT_DIM), jnp.float32)
    params = init_params(kp)

    emb = jax.block_until_ready(conv1d_encoder(x, params))
    assert emb.shape == (BATCH, OUTPUT_DIM), emb.shape

    ref = conv1d_encoder_reference(x, params)
    err = float(jnp.max(jnp.abs(emb - ref)))
    if err > 2e-3:
        raise AssertionError(f"Pallas kernel mismatch vs reference, max abs err={err}")

    print("KERNEL_OK")
</pallas_src>

<mosaic_0001>
module attributes {stable_mosaic.version = 11 : i64} {
  func.func @_conv_stack_kernel(%arg0: memref<512x5xf32, #tpu.memory_space<vmem>>, %arg1: memref<5x16xf32, #tpu.memory_space<vmem>>, %arg2: memref<1x16xf32, #tpu.memory_space<vmem>>, %arg3: memref<80x16xf32, #tpu.memory_space<vmem>>, %arg4: memref<1x16xf32, #tpu.memory_space<vmem>>, %arg5: memref<80x16xf32, #tpu.memory_space<vmem>>, %arg6: memref<1x16xf32, #tpu.memory_space<vmem>>, %arg7: memref<128x16xf32, #tpu.memory_space<vmem>>, %arg8: memref<576x16xf32, #tpu.memory_space<vmem>>, %arg9: memref<320x16xf32, #tpu.memory_space<vmem>>) attributes {dimension_semantics = [], scalar_prefetch = 0 : i64, scratch_operands = 2 : i64, tpu.core_type = #tpu.core_type<tc>} {
    %c0 = arith.constant 0 : index
    %c0_0 = arith.constant 0 : index
    %0 = vector.load %arg0[%c0, %c0_0] : memref<512x5xf32, #tpu.memory_space<vmem>>, vector<512x5xf32>
    %c0_1 = arith.constant 0 : index
    %c0_2 = arith.constant 0 : index
    %1 = vector.load %arg1[%c0_1, %c0_2] : memref<5x16xf32, #tpu.memory_space<vmem>>, vector<5x16xf32>
    %cst = arith.constant dense<0.000000e+00> : vector<512x16xf32>
    %2 = tpu.matmul %0, %1, %cst {dimension_numbers = #tpu.dot_dimension_numbers<[1], [0], [0], [1], [0, 0, 1, 1], [], []>} : vector<512x5xf32>, vector<5x16xf32>, vector<512x16xf32> -> vector<512x16xf32>
    %c0_3 = arith.constant 0 : index
    %c0_4 = arith.constant 0 : index
    %3 = vector.load %arg2[%c0_3, %c0_4] : memref<1x16xf32, #tpu.memory_space<vmem>>, vector<1x16xf32>
    %4 = vector.broadcast %3 : vector<1x16xf32> to vector<512x16xf32>
    %5 = arith.addf %2, %4 : vector<512x16xf32>
    %cst_5 = arith.constant 0.000000e+00 : f32
    %6 = vector.broadcast %cst_5 : f32 to vector<512x16xf32>
    %7 = arith.maximumf %5, %6 : vector<512x16xf32>
    %cst_6 = arith.constant 0.000000e+00 : f32
    %8 = vector.broadcast %cst_6 : f32 to vector<2x16xf32>
    %c6 = arith.constant 6 : index
    %c0_7 = arith.constant 0 : index
    %9 = vector.load %arg8[%c6, %c0_7] : memref<576x16xf32, #tpu.memory_space<vmem>>, vector<2x16xf32>
    tpu.vector_store %arg8[%c6, %c0_7], %8 {strides = array<i32>} : memref<576x16xf32, #tpu.memory_space<vmem>>, vector<2x16xf32>,
    %c136 = arith.constant 136 : index
    %c0_8 = arith.constant 0 : index
    %10 = vector.load %arg8[%c136, %c0_8] : memref<576x16xf32, #tpu.memory_space<vmem>>, vector<2x16xf32>
    tpu.vector_store %arg8[%c136, %c0_8], %8 {strides = array<i32>} : memref<576x16xf32, #tpu.memory_space<vmem>>, vector<2x16xf32>,
    %11 = vector.extract_strided_slice %7 {offsets = [0, 0], sizes = [128, 16], strides = [1, 1]} : vector<512x16xf32> to vector<128x16xf32>
    %c8 = arith.constant 8 : index
    %c0_9 = arith.constant 0 : index
    %12 = vector.load %arg8[%c8, %c0_9] : memref<576x16xf32, #tpu.memory_space<vmem>>, vector<128x16xf32>
    tpu.vector_store %arg8[%c8, %c0_9], %11 {strides = array<i32>} : memref<576x16xf32, #tpu.memory_space<vmem>>, vector<128x16xf32>,
    %c150 = arith.constant 150 : index
    %c0_10 = arith.constant 0 : index
    %13 = vector.load %arg8[%c150, %c0_10] : memref<576x16xf32, #tpu.memory_space<vmem>>, vector<2x16xf32>
    tpu.vector_store %arg8[%c150, %c0_10], %8 {strides = array<i32>} : memref<576x16xf32, #tpu.memory_space<vmem>>, vector<2x16xf32>,
    %c280 = arith.constant 280 : index
    %c0_11 = arith.constant 0 : index
    %14 = vector.load %arg8[%c280, %c0_11] : memref<576x16xf32, #tpu.memory_space<vmem>>, vector<2x16xf32>
    tpu.vector_store %arg8[%c280, %c0_11], %8 {strides = array<i32>} : memref<576x16xf32, #tpu.memory_space<vmem>>, vector<2x16xf32>,
    %15 = vector.extract_strided_slice %7 {offsets = [128, 0], sizes = [128, 16], strides = [1, 1]} : vector<512x16xf32> to vector<128x16xf32>
    %c152 = arith.constant 152 : index
    %c0_12 = arith.constant 0 : index
    %16 = vector.load %arg8[%c152, %c0_12] : memref<576x16xf32, #tpu.memory_space<vmem>>, vector<128x16xf32>
    tpu.vector_store %arg8[%c152, %c0_12], %15 {strides = array<i32>} : memref<576x16xf32, #tpu.memory_space<vmem>>, vector<128x16xf32>,
    %c294 = arith.constant 294 : index
    %c0_13 = arith.constant 0 : index
    %17 = vector.load %arg8[%c294, %c0_13] : memref<576x16xf32, #tpu.memory_space<vmem>>, vector<2x16xf32>
    tpu.vector_store %arg8[%c294, %c0_13], %8 {strides = array<i32>} : memref<576x16xf32, #tpu.memory_space<vmem>>, vector<2x16xf32>,
    %c424 = arith.constant 424 : index
    %c0_14 = arith.constant 0 : index
    %18 = vector.load %arg8[%c424, %c0_14] : memref<576x16xf32, #tpu.memory_space<vmem>>, vector<2x16xf32>
    tpu.vector_store %arg8[%c424, %c0_14], %8 {strides = array<i32>} : memref<576x16xf32, #tpu.memory_space<vmem>>, vector<2x16xf32>,
    %19 = vector.extract_strided_slice %7 {offsets = [256, 0], sizes = [128, 16], strides = [1, 1]} : vector<512x16xf32> to vector<128x16xf32>
    %c296 = arith.constant 296 : index
    %c0_15 = arith.constant 0 : index
    %20 = vector.load %arg8[%c296, %c0_15] : memref<576x16xf32, #tpu.memory_space<vmem>>, vector<128x16xf32>
    tpu.vector_store %arg8[%c296, %c0_15], %19 {strides = array<i32>} : memref<576x16xf32, #tpu.memory_space<vmem>>, vector<128x16xf32>,
    %c438 = arith.constant 438 : index
    %c0_16 = arith.constant 0 : index
    %21 = vector.load %arg8[%c438, %c0_16] : memref<576x16xf32, #tpu.memory_space<vmem>>, vector<2x16xf32>
    tpu.vector_store %arg8[%c438, %c0_16], %8 {strides = array<i32>} : memref<576x16xf32, #tpu.memory_space<vmem>>, vector<2x16xf32>,
    %c568 = arith.constant 568 : index
    %c0_17 = arith.constant 0 : index
    %22 = vector.load %arg8[%c568, %c0_17] : memref<576x16xf32, #tpu.memory_space<vmem>>, vector<2x16xf32>
    tpu.vector_store %arg8[%c568, %c0_17], %8 {strides = array<i32>} : memref<576x16xf32, #tpu.memory_space<vmem>>, vector<2x16xf32>,
    %23 = vector.extract_strided_slice %7 {offsets = [384, 0], sizes = [128, 16], strides = [1, 1]} : vector<512x16xf32> to vector<128x16xf32>
    %c440 = arith.constant 440 : index
    %c0_18 = arith.constant 0 : index
    %24 = vector.load %arg8[%c440, %c0_18] : memref<576x16xf32, #tpu.memory_space<vmem>>, vector<128x16xf32>
    tpu.vector_store %arg8[%c440, %c0_18], %23 {strides = array<i32>} : memref<576x16xf32, #tpu.memory_space<vmem>>, vector<128x16xf32>,
    %c6_19 = arith.constant 6 : index
    %c0_20 = arith.constant 0 : index
    %25 = tpu.strided_load %arg8[%c6_19, %c0_20] {strides = array<i32: 2, 1>} : memref<576x16xf32, #tpu.memory_space<vmem>>, vector<64x16xf32>
    %c150_21 = arith.constant 150 : index
    %c0_22 = arith.constant 0 : index
    %26 = tpu.strided_load %arg8[%c150_21, %c0_22] {strides = array<i32: 2, 1>} : memref<576x16xf32, #tpu.memory_space<vmem>>, vector<64x16xf32>
    %c294_23 = arith.constant 294 : index
    %c0_24 = arith.constant 0 : index
    %27 = tpu.strided_load %arg8[%c294_23, %c0_24] {strides = array<i32: 2, 1>} : memref<576x16xf32, #tpu.memory_space<vmem>>, vector<64x16xf32>
    %c438_25 = arith.constant 438 : index
    %c0_26 = arith.constant 0 : index
    %28 = tpu.strided_load %arg8[%c438_25, %c0_26] {strides = array<i32: 2, 1>} : memref<576x16xf32, #tpu.memory_space<vmem>>, vector<64x16xf32>
    %29 = tpu.concatenate %25, %26, %27, %28 in 0 : vector<64x16xf32>, vector<64x16xf32>, vector<64x16xf32>, vector<64x16xf32> -> vector<256x16xf32>
    %c7 = arith.constant 7 : index
    %c0_27 = arith.constant 0 : index
    %30 = tpu.strided_load %arg8[%c7, %c0_27] {strides = array<i32: 2, 1>} : memref<576x16xf32, #tpu.memory_space<vmem>>, vector<64x16xf32>
    %c151 = arith.constant 151 : index
    %c0_28 = arith.constant 0 : index
    %31 = tpu.strided_load %arg8[%c151, %c0_28] {strides = array<i32: 2, 1>} : memref<576x16xf32, #tpu.memory_space<vmem>>, vector<64x16xf32>
    %c295 = arith.constant 295 : index
    %c0_29 = arith.constant 0 : index
    %32 = tpu.strided_load %arg8[%c295, %c0_29] {strides = array<i32: 2, 1>} : memref<576x16xf32, #tpu.memory_space<vmem>>, vector<64x16xf32>
    %c439 = arith.constant 439 : index
    %c0_30 = arith.constant 0 : index
    %33 = tpu.strided_load %arg8[%c439, %c0_30] {strides = array<i32: 2, 1>} : memref<576x16xf32, #tpu.memory_space<vmem>>, vector<64x16xf32>
    %34 = tpu.concatenate %30, %31, %32, %33 in 0 : vector<64x16xf32>, vector<64x16xf32>, vector<64x16xf32>, vector<64x16xf32> -> vector<256x16xf32>
    %c8_31 = arith.constant 8 : index
    %c0_32 = arith.constant 0 : index
    %35 = tpu.strided_load %arg8[%c8_31, %c0_32] {strides = array<i32: 2, 1>} : memref<576x16xf32, #tpu.memory_space<vmem>>, vector<64x16xf32>
    %c152_33 = arith.constant 152 : index
    %c0_34 = arith.constant 0 : index
    %36 = tpu.strided_load %arg8[%c152_33, %c0_34] {strides = array<i32: 2, 1>} : memref<576x16xf32, #tpu.memory_space<vmem>>, vector<64x16xf32>
    %c296_35 = arith.constant 296 : index
    %c0_36 = arith.constant 0 : index
    %37 = tpu.strided_load %arg8[%c296_35, %c0_36] {strides = array<i32: 2, 1>} : memref<576x16xf32, #tpu.memory_space<vmem>>, vector<64x16xf32>
    %c440_37 = arith.constant 440 : index
    %c0_38 = arith.constant 0 : index
    %38 = tpu.strided_load %arg8[%c440_37, %c0_38] {strides = array<i32: 2, 1>} : memref<576x16xf32, #tpu.memory_space<vmem>>, vector<64x16xf32>
    %39 = tpu.concatenate %35, %36, %37, %38 in 0 : vector<64x16xf32>, vector<64x16xf32>, vector<64x16xf32>, vector<64x16xf32> -> vector<256x16xf32>
    %c9 = arith.constant 9 : index
    %c0_39 = arith.constant 0 : index
    %40 = tpu.strided_load %arg8[%c9, %c0_39] {strides = array<i32: 2, 1>} : memref<576x16xf32, #tpu.memory_space<vmem>>, vector<64x16xf32>
    %c153 = arith.constant 153 : index
    %c0_40 = arith.constant 0 : index
    %41 = tpu.strided_load %arg8[%c153, %c0_40] {strides = array<i32: 2, 1>} : memref<576x16xf32, #tpu.memory_space<vmem>>, vector<64x16xf32>
    %c297 = arith.constant 297 : index
    %c0_41 = arith.constant 0 : index
    %42 = tpu.strided_load %arg8[%c297, %c0_41] {strides = array<i32: 2, 1>} : memref<576x16xf32, #tpu.memory_space<vmem>>, vector<64x16xf32>
    %c441 = arith.constant 441 : index
    %c0_42 = arith.constant 0 : index
    %43 = tpu.strided_load %arg8[%c441, %c0_42] {strides = array<i32: 2, 1>} : memref<576x16xf32, #tpu.memory_space<vmem>>, vector<64x16xf32>
    %44 = tpu.concatenate %40, %41, %42, %43 in 0 : vector<64x16xf32>, vector<64x16xf32>, vector<64x16xf32>, vector<64x16xf32> -> vector<256x16xf32>
    %c10 = arith.constant 10 : index
    %c0_43 = arith.constant 0 : index
    %45 = tpu.strided_load %arg8[%c10, %c0_43] {strides = array<i32: 2, 1>} : memref<576x16xf32, #tpu.memory_space<vmem>>, vector<64x16xf32>
    %c154 = arith.constant 154 : index
    %c0_44 = arith.constant 0 : index
    %46 = tpu.strided_load %arg8[%c154, %c0_44] {strides = array<i32: 2, 1>} : memref<576x16xf32, #tpu.memory_space<vmem>>, vector<64x16xf32>
    %c298 = arith.constant 298 : index
    %c0_45 = arith.constant 0 : index
    %47 = tpu.strided_load %arg8[%c298, %c0_45] {strides = array<i32: 2, 1>} : memref<576x16xf32, #tpu.memory_space<vmem>>, vector<64x16xf32>
    %c442 = arith.constant 442 : index
    %c0_46 = arith.constant 0 : index
    %48 = tpu.strided_load %arg8[%c442, %c0_46] {strides = array<i32: 2, 1>} : memref<576x16xf32, #tpu.memory_space<vmem>>, vector<64x16xf32>
    %49 = tpu.concatenate %45, %46, %47, %48 in 0 : vector<64x16xf32>, vector<64x16xf32>, vector<64x16xf32>, vector<64x16xf32> -> vector<256x16xf32>
    %50 = tpu.concatenate %29, %34, %39, %44, %49 in 1 : vector<256x16xf32>, vector<256x16xf32>, vector<256x16xf32>, vector<256x16xf32>, vector<256x16xf32> -> vector<256x80xf32>
    %c0_47 = arith.constant 0 : index
    %c0_48 = arith.constant 0 : index
    %51 = vector.load %arg3[%c0_47, %c0_48] : memref<80x16xf32, #tpu.memory_space<vmem>>, vector<80x16xf32>
    %cst_49 = arith.constant dense<0.000000e+00> : vector<256x16xf32>
    %52 = tpu.matmul %50, %51, %cst_49 {dimension_numbers = #tpu.dot_dimension_numbers<[1], [0], [0], [1], [0, 0, 1, 1], [], []>} : vector<256x80xf32>, vector<80x16xf32>, vector<256x16xf32> -> vector<256x16xf32>
    %c0_50 = arith.constant 0 : index
    %c0_51 = arith.constant 0 : index
    %53 = vector.load %arg4[%c0_50, %c0_51] : memref<1x16xf32, #tpu.memory_space<vmem>>, vector<1x16xf32>
    %54 = vector.broadcast %53 : vector<1x16xf32> to vector<256x16xf32>
    %55 = arith.addf %52, %54 : vector<256x16xf32>
    %cst_52 = arith.constant 0.000000e+00 : f32
    %56 = vector.broadcast %cst_52 : f32 to vector<256x16xf32>
    %57 = arith.maximumf %55, %56 : vector<256x16xf32>
    %cst_53 = arith.constant 0.000000e+00 : f32
    %58 = vector.broadcast %cst_53 : f32 to vector<2x16xf32>
    %c6_54 = arith.constant 6 : index
    %c0_55 = arith.constant 0 : index
    %59 = vector.load %arg9[%c6_54, %c0_55] : memref<320x16xf32, #tpu.memory_space<vmem>>, vector<2x16xf32>
    tpu.vector_store %arg9[%c6_54, %c0_55], %58 {strides = array<i32>} : memref<320x16xf32, #tpu.memory_space<vmem>>, vector<2x16xf32>,
    %c72 = arith.constant 72 : index
    %c0_56 = arith.constant 0 : index
    %60 = vector.load %arg9[%c72, %c0_56] : memref<320x16xf32, #tpu.memory_space<vmem>>, vector<2x16xf32>
    tpu.vector_store %arg9[%c72, %c0_56], %58 {strides = array<i32>} : memref<320x16xf32, #tpu.memory_space<vmem>>, vector<2x16xf32>,
    %61 = vector.extract_strided_slice %57 {offsets = [0, 0], sizes = [64, 16], strides = [1, 1]} : vector<256x16xf32> to vector<64x16xf32>
    %c8_57 = arith.constant 8 : index
    %c0_58 = arith.constant 0 : index
    %62 = vector.load %arg9[%c8_57, %c0_58] : memref<320x16xf32, #tpu.memory_space<vmem>>, vector<64x16xf32>
    tpu.vector_store %arg9[%c8_57, %c0_58], %61 {strides = array<i32>} : memref<320x16xf32, #tpu.memory_space<vmem>>, vector<64x16xf32>,
    %c86 = arith.constant 86 : index
    %c0_59 = arith.constant 0 : index
    %63 = vector.load %arg9[%c86, %c0_59] : memref<320x16xf32, #tpu.memory_space<vmem>>, vector<2x16xf32>
    tpu.vector_store %arg9[%c86, %c0_59], %58 {strides = array<i32>} : memref<320x16xf32, #tpu.memory_space<vmem>>, vector<2x16xf32>,
    %c152_60 = arith.constant 152 : index
    %c0_61 = arith.constant 0 : index
    %64 = vector.load %arg9[%c152_60, %c0_61] : memref<320x16xf32, #tpu.memory_space<vmem>>, vector<2x16xf32>
    tpu.vector_store %arg9[%c152_60, %c0_61], %58 {strides = array<i32>} : memref<320x16xf32, #tpu.memory_space<vmem>>, vector<2x16xf32>,
    %65 = vector.extract_strided_slice %57 {offsets = [64, 0], sizes = [64, 16], strides = [1, 1]} : vector<256x16xf32> to vector<64x16xf32>
    %c88 = arith.constant 88 : index
    %c0_62 = arith.constant 0 : index
    %66 = vector.load %arg9[%c88, %c0_62] : memref<320x16xf32, #tpu.memory_space<vmem>>, vector<64x16xf32>
    tpu.vector_store %arg9[%c88, %c0_62], %65 {strides = array<i32>} : memref<320x16xf32, #tpu.memory_space<vmem>>, vector<64x16xf32>,
    %c166 = arith.constant 166 : index
    %c0_63 = arith.constant 0 : index
    %67 = vector.load %arg9[%c166, %c0_63] : memref<320x16xf32, #tpu.memory_space<vmem>>, vector<2x16xf32>
    tpu.vector_store %arg9[%c166, %c0_63], %58 {strides = array<i32>} : memref<320x16xf32, #tpu.memory_space<vmem>>, vector<2x16xf32>,
    %c232 = arith.constant 232 : index
    %c0_64 = arith.constant 0 : index
    %68 = vector.load %arg9[%c232, %c0_64] : memref<320x16xf32, #tpu.memory_space<vmem>>, vector<2x16xf32>
    tpu.vector_store %arg9[%c232, %c0_64], %58 {strides = array<i32>} : memref<320x16xf32, #tpu.memory_space<vmem>>, vector<2x16xf32>,
    %69 = vector.extract_strided_slice %57 {offsets = [128, 0], sizes = [64, 16], strides = [1, 1]} : vector<256x16xf32> to vector<64x16xf32>
    %c168 = arith.constant 168 : index
    %c0_65 = arith.constant 0 : index
    %70 = vector.load %arg9[%c168, %c0_65] : memref<320x16xf32, #tpu.memory_space<vmem>>, vector<64x16xf32>
    tpu.vector_store %arg9[%c168, %c0_65], %69 {strides = array<i32>} : memref<320x16xf32, #tpu.memory_space<vmem>>, vector<64x16xf32>,
    %c246 = arith.constant 246 : index
    %c0_66 = arith.constant 0 : index
    %71 = vector.load %arg9[%c246, %c0_66] : memref<320x16xf32, #tpu.memory_space<vmem>>, vector<2x16xf32>
    tpu.vector_store %arg9[%c246, %c0_66], %58 {strides = array<i32>} : memref<320x16xf32, #tpu.memory_space<vmem>>, vector<2x16xf32>,
    %c312 = arith.constant 312 : index
    %c0_67 = arith.constant 0 : index
    %72 = vector.load %arg9[%c312, %c0_67] : memref<320x16xf32, #tpu.memory_space<vmem>>, vector<2x16xf32>
    tpu.vector_store %arg9[%c312, %c0_67], %58 {strides = array<i32>} : memref<320x16xf32, #tpu.memory_space<vmem>>, vector<2x16xf32>,
    %73 = vector.extract_strided_slice %57 {offsets = [192, 0], sizes = [64, 16], strides = [1, 1]} : vector<256x16xf32> to vector<64x16xf32>
    %c248 = arith.constant 248 : index
    %c0_68 = arith.constant 0 : index
    %74 = vector.load %arg9[%c248, %c0_68] : memref<320x16xf32, #tpu.memory_space<vmem>>, vector<64x16xf32>
    tpu.vector_store %arg9[%c248, %c0_68], %73 {strides = array<i32>} : memref<320x16xf32, #tpu.memory_space<vmem>>, vector<64x16xf32>,
    %c6_69 = arith.constant 6 : index
    %c0_70 = arith.constant 0 : index
    %75 = tpu.strided_load %arg9[%c6_69, %c0_70] {strides = array<i32: 2, 1>} : memref<320x16xf32, #tpu.memory_space<vmem>>, vector<32x16xf32>
    %c86_71 = arith.constant 86 : index
    %c0_72 = arith.constant 0 : index
    %76 = tpu.strided_load %arg9[%c86_71, %c0_72] {strides = array<i32: 2, 1>} : memref<320x16xf32, #tpu.memory_space<vmem>>, vector<32x16xf32>
    %c166_73 = arith.constant 166 : index
    %c0_74 = arith.constant 0 : index
    %77 = tpu.strided_load %arg9[%c166_73, %c0_74] {strides = array<i32: 2, 1>} : memref<320x16xf32, #tpu.memory_space<vmem>>, vector<32x16xf32>
    %c246_75 = arith.constant 246 : index
    %c0_76 = arith.constant 0 : index
    %78 = tpu.strided_load %arg9[%c246_75, %c0_76] {strides = array<i32: 2, 1>} : memref<320x16xf32, #tpu.memory_space<vmem>>, vector<32x16xf32>
    %79 = tpu.concatenate %75, %76, %77, %78 in 0 : vector<32x16xf32>, vector<32x16xf32>, vector<32x16xf32>, vector<32x16xf32> -> vector<128x16xf32>
    %c7_77 = arith.constant 7 : index
    %c0_78 = arith.constant 0 : index
    %80 = tpu.strided_load %arg9[%c7_77, %c0_78] {strides = array<i32: 2, 1>} : memref<320x16xf32, #tpu.memory_space<vmem>>, vector<32x16xf32>
    %c87 = arith.constant 87 : index
    %c0_79 = arith.constant 0 : index
    %81 = tpu.strided_load %arg9[%c87, %c0_79] {strides = array<i32: 2, 1>} : memref<320x16xf32, #tpu.memory_space<vmem>>, vector<32x16xf32>
    %c167 = arith.constant 167 : index
    %c0_80 = arith.constant 0 : index
    %82 = tpu.strided_load %arg9[%c167, %c0_80] {strides = array<i32: 2, 1>} : memref<320x16xf32, #tpu.memory_space<vmem>>, vector<32x16xf32>
    %c247 = arith.constant 247 : index
    %c0_81 = arith.constant 0 : index
    %83 = tpu.strided_load %arg9[%c247, %c0_81] {strides = array<i32: 2, 1>} : memref<320x16xf32, #tpu.memory_space<vmem>>, vector<32x16xf32>
    %84 = tpu.concatenate %80, %81, %82, %83 in 0 : vector<32x16xf32>, vector<32x16xf32>, vector<32x16xf32>, vector<32x16xf32> -> vector<128x16xf32>
    %c8_82 = arith.constant 8 : index
    %c0_83 = arith.constant 0 : index
    %85 = tpu.strided_load %arg9[%c8_82, %c0_83] {strides = array<i32: 2, 1>} : memref<320x16xf32, #tpu.memory_space<vmem>>, vector<32x16xf32>
    %c88_84 = arith.constant 88 : index
    %c0_85 = arith.constant 0 : index
    %86 = tpu.strided_load %arg9[%c88_84, %c0_85] {strides = array<i32: 2, 1>} : memref<320x16xf32, #tpu.memory_space<vmem>>, vector<32x16xf32>
    %c168_86 = arith.constant 168 : index
    %c0_87 = arith.constant 0 : index
    %87 = tpu.strided_load %arg9[%c168_86, %c0_87] {strides = array<i32: 2, 1>} : memref<320x16xf32, #tpu.memory_space<vmem>>, vector<32x16xf32>
    %c248_88 = arith.constant 248 : index
    %c0_89 = arith.constant 0 : index
    %88 = tpu.strided_load %arg9[%c248_88, %c0_89] {strides = array<i32: 2, 1>} : memref<320x16xf32, #tpu.memory_space<vmem>>, vector<32x16xf32>
    %89 = tpu.concatenate %85, %86, %87, %88 in 0 : vector<32x16xf32>, vector<32x16xf32>, vector<32x16xf32>, vector<32x16xf32> -> vector<128x16xf32>
    %c9_90 = arith.constant 9 : index
    %c0_91 = arith.constant 0 : index
    %90 = tpu.strided_load %arg9[%c9_90, %c0_91] {strides = array<i32: 2, 1>} : memref<320x16xf32, #tpu.memory_space<vmem>>, vector<32x16xf32>
    %c89 = arith.constant 89 : index
    %c0_92 = arith.constant 0 : index
    %91 = tpu.strided_load %arg9[%c89, %c0_92] {strides = array<i32: 2, 1>} : memref<320x16xf32, #tpu.memory_space<vmem>>, vector<32x16xf32>
    %c169 = arith.constant 169 : index
    %c0_93 = arith.constant 0 : index
    %92 = tpu.strided_load %arg9[%c169, %c0_93] {strides = array<i32: 2, 1>} : memref<320x16xf32, #tpu.memory_space<vmem>>, vector<32x16xf32>
    %c249 = arith.constant 249 : index
    %c0_94 = arith.constant 0 : index
    %93 = tpu.strided_load %arg9[%c249, %c0_94] {strides = array<i32: 2, 1>} : memref<320x16xf32, #tpu.memory_space<vmem>>, vector<32x16xf32>
    %94 = tpu.concatenate %90, %91, %92, %93 in 0 : vector<32x16xf32>, vector<32x16xf32>, vector<32x16xf32>, vector<32x16xf32> -> vector<128x16xf32>
    %c10_95 = arith.constant 10 : index
    %c0_96 = arith.constant 0 : index
    %95 = tpu.strided_load %arg9[%c10_95, %c0_96] {strides = array<i32: 2, 1>} : memref<320x16xf32, #tpu.memory_space<vmem>>, vector<32x16xf32>
    %c90 = arith.constant 90 : index
    %c0_97 = arith.constant 0 : index
    %96 = tpu.strided_load %arg9[%c90, %c0_97] {strides = array<i32: 2, 1>} : memref<320x16xf32, #tpu.memory_space<vmem>>, vector<32x16xf32>
    %c170 = arith.constant 170 : index
    %c0_98 = arith.constant 0 : index
    %97 = tpu.strided_load %arg9[%c170, %c0_98] {strides = array<i32: 2, 1>} : memref<320x16xf32, #tpu.memory_space<vmem>>, vector<32x16xf32>
    %c250 = arith.constant 250 : index
    %c0_99 = arith.constant 0 : index
    %98 = tpu.strided_load %arg9[%c250, %c0_99] {strides = array<i32: 2, 1>} : memref<320x16xf32, #tpu.memory_space<vmem>>, vector<32x16xf32>
    %99 = tpu.concatenate %95, %96, %97, %98 in 0 : vector<32x16xf32>, vector<32x16xf32>, vector<32x16xf32>, vector<32x16xf32> -> vector<128x16xf32>
    %100 = tpu.concatenate %79, %84, %89, %94, %99 in 1 : vector<128x16xf32>, vector<128x16xf32>, vector<128x16xf32>, vector<128x16xf32>, vector<128x16xf32> -> vector<128x80xf32>
    %c0_100 = arith.constant 0 : index
    %c0_101 = arith.constant 0 : index
    %101 = vector.load %arg5[%c0_100, %c0_101] : memref<80x16xf32, #tpu.memory_space<vmem>>, vector<80x16xf32>
    %cst_102 = arith.constant dense<0.000000e+00> : vector<128x16xf32>
    %102 = tpu.matmul %100, %101, %cst_102 {dimension_numbers = #tpu.dot_dimension_numbers<[1], [0], [0], [1], [0, 0, 1, 1], [], []>} : vector<128x80xf32>, vector<80x16xf32>, vector<128x16xf32> -> vector<128x16xf32>
    %c0_103 = arith.constant 0 : index
    %c0_104 = arith.constant 0 : index
    %103 = vector.load %arg6[%c0_103, %c0_104] : memref<1x16xf32, #tpu.memory_space<vmem>>, vector<1x16xf32>
    %104 = vector.broadcast %103 : vector<1x16xf32> to vector<128x16xf32>
    %105 = arith.addf %102, %104 : vector<128x16xf32>
    %cst_105 = arith.constant 0.000000e+00 : f32
    %106 = vector.broadcast %cst_105 : f32 to vector<128x16xf32>
    %107 = arith.maximumf %105, %106 : vector<128x16xf32>
    %c0_106 = arith.constant 0 : index
    %c0_107 = arith.constant 0 : index
    %108 = vector.load %arg7[%c0_106, %c0_107] : memref<128x16xf32, #tpu.memory_space<vmem>>, vector<128x16xf32>
    tpu.vector_store %arg7[%c0_106, %c0_107], %107 {strides = array<i32>} : memref<128x16xf32, #tpu.memory_space<vmem>>, vector<128x16xf32>,
    return
  }
}

module attributes {stable_mosaic.version = 11 : i64} {
  func.func @_fc_kernel(%arg0: memref<4x512xf32, #tpu.memory_space<vmem>>, %arg1: memref<512x128xf32, #tpu.memory_space<vmem>>, %arg2: memref<1x128xf32, #tpu.memory_space<vmem>>, %arg3: memref<4x128xf32, #tpu.memory_space<vmem>>) attributes {dimension_semantics = [], scalar_prefetch = 0 : i64, scratch_operands = 0 : i64, tpu.core_type = #tpu.core_type<tc>} {
    %c0 = arith.constant 0 : index
    %c0_0 = arith.constant 0 : index
    %0 = vector.load %arg0[%c0, %c0_0] : memref<4x512xf32, #tpu.memory_space<vmem>>, vector<4x512xf32>
    %c0_1 = arith.constant 0 : index
    %c0_2 = arith.constant 0 : index
    %1 = vector.load %arg1[%c0_1, %c0_2] : memref<512x128xf32, #tpu.memory_space<vmem>>, vector<512x128xf32>
    %cst = arith.constant dense<0.000000e+00> : vector<4x128xf32>
    %2 = tpu.matmul %0, %1, %cst {dimension_numbers = #tpu.dot_dimension_numbers<[1], [0], [0], [1], [0, 0, 1, 1], [], []>} : vector<4x512xf32>, vector<512x128xf32>, vector<4x128xf32> -> vector<4x128xf32>
    %c0_3 = arith.constant 0 : index
    %c0_4 = arith.constant 0 : index
    %3 = vector.load %arg2[%c0_3, %c0_4] : memref<1x128xf32, #tpu.memory_space<vmem>>, vector<1x128xf32>
    %4 = vector.broadcast %3 : vector<1x128xf32> to vector<4x128xf32>
    %5 = arith.addf %2, %4 : vector<4x128xf32>
    %c0_5 = arith.constant 0 : index
    %c0_6 = arith.constant 0 : index
    %6 = vector.load %arg3[%c0_5, %c0_6] : memref<4x128xf32, #tpu.memory_space<vmem>>, vector<4x128xf32>
    tpu.vector_store %arg3[%c0_5, %c0_6], %5 {strides = array<i32>} : memref<4x128xf32, #tpu.memory_space<vmem>>, vector<4x128xf32>,
    return
  }
}

</mosaic_0001>

<llo_original>
// kernel: conv1d_encoder.3
$region0: #{conv1d_encoder.3}
  #allocation0 [shape = 'u32[]', space=smem, size = 0x4, offset = 0x4, fixed_abs, tag = 'smem constant byte address 0x4 - core index']
  #allocation1 [shape = 'u32[72,128]{1,0:T(1,128)}', space=vmem, size = 0x9000, scoped, tag = 'internal scratch']
  %s0 = inlined_call_operand.vmem [shape: f32[4,512], index: 0, kind: input, shape index: {}]
  %s1 = inlined_call_operand.vmem [shape: f32[512,128], index: 1, kind: input, shape index: {}]
  %s2 = inlined_call_operand.vmem [shape: f32[1,128], index: 2, kind: input, shape index: {}]
  %s3 = inlined_call_operand.hbm [shape: f32[4,128], index: 3, kind: output, shape index: {}]
  %s4 = sld [smem:[#allocation0]]
  $region22: #{conv1d_encoder.3} parent=0
    _
  %s6 = ssub.s32 1, %s4
  %s7 = scalar_select 0, %s6, %s4
  $region1: #{conv1d_encoder.3} parent=0
    #allocation2 [shape = 'u8[2048]{0}', space=vmem, size = 0x800, scoped, tag = 'output window, operand 0, single buffered']
    #allocation3 [shape = 's32[1]{0}', space=sflag, size = 0x4, scoped, tag = 'scoped memory for conv1d_encoder.3']
    %8 = vsyncpa [#allocation3], 0
    // Predicated region
    $region2: #{conv1d_encoder.3} parent=1 // pred_check
      _
    $region3: #{conv1d_encoder.3} parent=1 // pred_check_branch
      %10 = sbr.rel (0) target = $region5
    $region4: #{conv1d_encoder.3} parent=1 // pred_region
      _
    $region5: #{conv1d_encoder.3} parent=1 // pred_fallthru
      _
    // Predicated region
    $region6: #{conv1d_encoder.3} parent=1 // pred_check
      _
    $region7: #{conv1d_encoder.3} parent=1 // pred_check_branch
      %12 = sbr.rel (0) target = $region9
    $region8: #{conv1d_encoder.3} parent=1 // pred_region
      _
    $region9: #{conv1d_encoder.3} parent=1 // pred_fallthru
      _
    // Predicated region
    $region10: #{conv1d_encoder.3} parent=1 // pred_check
      _
    $region11: #{conv1d_encoder.3} parent=1 // pred_check_branch
      %14 = sbr.rel (0) target = $region13
    $region12: #{conv1d_encoder.3} parent=1 // pred_region
      _
    $region13: #{conv1d_encoder.3} parent=1 // pred_fallthru
      _
    %v15 = vld [vmem:[%s0] sm:$0xff]
    %v16 = vld [vmem:[%s0 + $0x8] sm:$0xff]
    %v17 = vld [vmem:[%s1] sm:$0xff]
    %v18 = vld [vmem:[%s1 + $0x8] sm:$0xff]
    %v19 = vld [vmem:[%s1 + $0x10] sm:$0xff]
    %v20 = vld [vmem:[%s1 + $0x18] sm:$0xff]
    %v21 = vld [vmem:[%s1 + $0x20] sm:$0xff]
    %v22 = vld [vmem:[%s1 + $0x28] sm:$0xff]
    %v23 = vld [vmem:[%s1 + $0x30] sm:$0xff]
    %v24 = vld [vmem:[%s1 + $0x38] sm:$0xff]
    %v25 = vld [vmem:[%s1 + $0x40] sm:$0xff]
    %v26 = vld [vmem:[%s1 + $0x48] sm:$0xff]
    %v27 = vld [vmem:[%s1 + $0x50] sm:$0xff]
    %v28 = vld [vmem:[%s1 + $0x58] sm:$0xff]
    %v29 = vld [vmem:[%s1 + $0x60] sm:$0xff]
    %v30 = vld [vmem:[%s1 + $0x68] sm:$0xff]
    %v31 = vld [vmem:[%s1 + $0x70] sm:$0xff]
    %v32 = vld [vmem:[%s1 + $0x78] sm:$0xff]
    %v33 = vld [vmem:[%s1 + $0x80] sm:$0xff]
    %v34 = vld [vmem:[%s1 + $0x88] sm:$0xff]
    %v35 = vld [vmem:[%s1 + $0x90] sm:$0xff]
    %v36 = vld [vmem:[%s1 + $0x98] sm:$0xff]
    %v37 = vld [vmem:[%s1 + $0xa0] sm:$0xff]
    %v38 = vld [vmem:[%s1 + $0xa8] sm:$0xff]
    %v39 = vld [vmem:[%s1 + $0xb0] sm:$0xff]
    %v40 = vld [vmem:[%s1 + $0xb8] sm:$0xff]
    %v41 = vld [vmem:[%s1 + $0xc0] sm:$0xff]
    %v42 = vld [vmem:[%s1 + $0xc8] sm:$0xff]
    %v43 = vld [vmem:[%s1 + $0xd0] sm:$0xff]
    %v44 = vld [vmem:[%s1 + $0xd8] sm:$0xff]
    %v45 = vld [vmem:[%s1 + $0xe0] sm:$0xff]
    %v46 = vld [vmem:[%s1 + $0xe8] sm:$0xff]
    %v47 = vld [vmem:[%s1 + $0xf0] sm:$0xff]
    %v48 = vld [vmem:[%s1 + $0xf8] sm:$0xff]
    %v49 = vld [vmem:[%s1 + $0x100] sm:$0xff]
    %v50 = vld [vmem:[%s1 + $0x108] sm:$0xff]
    %v51 = vld [vmem:[%s1 + $0x110] sm:$0xff]
    %v52 = vld [vmem:[%s1 + $0x118] sm:$0xff]
    %v53 = vld [vmem:[%s1 + $0x120] sm:$0xff]
    %v54 = vld [vmem:[%s1 + $0x128] sm:$0xff]
    %v55 = vld [vmem:[%s1 + $0x130] sm:$0xff]
    %v56 = vld [vmem:[%s1 + $0x138] sm:$0xff]
    %v57 = vld [vmem:[%s1 + $0x140] sm:$0xff]
    %v58 = vld [vmem:[%s1 + $0x148] sm:$0xff]
    %v59 = vld [vmem:[%s1 + $0x150] sm:$0xff]
    %v60 = vld [vmem:[%s1 + $0x158] sm:$0xff]
    %v61 = vld [vmem:[%s1 + $0x160] sm:$0xff]
    %v62 = vld [vmem:[%s1 + $0x168] sm:$0xff]
    %v63 = vld [vmem:[%s1 + $0x170] sm:$0xff]
    %v64 = vld [vmem:[%s1 + $0x178] sm:$0xff]
    %v65 = vld [vmem:[%s1 + $0x180] sm:$0xff]
    %v66 = vld [vmem:[%s1 + $0x188] sm:$0xff]
    %v67 = vld [vmem:[%s1 + $0x190] sm:$0xff]
    %v68 = vld [vmem:[%s1 + $0x198] sm:$0xff]
    %v69 = vld [vmem:[%s1 + $0x1a0] sm:$0xff]
    %v70 = vld [vmem:[%s1 + $0x1a8] sm:$0xff]
    %v71 = vld [vmem:[%s1 + $0x1b0] sm:$0xff]
    %v72 = vld [vmem:[%s1 + $0x1b8] sm:$0xff]
    %v73 = vld [vmem:[%s1 + $0x1c0] sm:$0xff]
    %v74 = vld [vmem:[%s1 + $0x1c8] sm:$0xff]
    %v75 = vld [vmem:[%s1 + $0x1d0] sm:$0xff]
    %v76 = vld [vmem:[%s1 + $0x1d8] sm:$0xff]
    %v77 = vld [vmem:[%s1 + $0x1e0] sm:$0xff]
    %v78 = vld [vmem:[%s1 + $0x1e8] sm:$0xff]
    %v79 = vld [vmem:[%s1 + $0x1f0] sm:$0xff]
    %v80 = vld [vmem:[%s1 + $0x1f8] sm:$0xff]
    %v81 = vld [vmem:[%s2] sm:$0x1]
    %v83 = vperm.slane %v81, 0
    %87 = vst [vmem:[#allocation1] ss:$2 sm:$0xff] %v15
    %s88 = scalar_lea.vmem [#allocation1], 16
    %89 = vst [vmem:[%s88] ss:$2 sm:$0xff] %v16
    %v90 = vld.sshfl [vmem:[#allocation1] sm:$0xff pattern:$0x75316420]
    %v91 = vld.sshfl [vmem:[#allocation1 + $0x8] sm:$0xff pattern:$0x75316420]
    %v92 = vld.sshfl [vmem:[#allocation1 + $0x10] sm:$0xff pattern:$0x75316420]
    %v93 = vld.sshfl [vmem:[#allocation1 + $0x18] sm:$0xff pattern:$0x75316420]
    %98 = vmatpush.msra.mxu0 %v32
    %99 = vmatpush.msra.mxu0 %v31
    %100 = vmatpush.msra.mxu0 %v30
    %101 = vmatpush.msra.mxu0 %v29
    %102 = vmatpush.msra.mxu0 %v28
    %103 = vmatpush.msra.mxu0 %v27
    %104 = vmatpush.msra.mxu0 %v26
    %105 = vmatpush.msra.mxu0 %v25
    %106 = vmatpush.msra.mxu0 %v24
    %107 = vmatpush.msra.mxu0 %v23
    %108 = vmatpush.msra.mxu0 %v22
    %109 = vmatpush.msra.mxu0 %v21
    %110 = vmatpush.msra.mxu0 %v20
    %111 = vmatpush.msra.mxu0 %v19
    %112 = vmatpush.msra.mxu0 %v18
    %113 = vmatpush.msra.mxu0 %v17
    %114 = vmatmul.f32.gmra.mxu0 %v90
    %v115 = vpop.f32.mrf.mxu0
    %v116 = vadd.f32 %v83, %v115
    %117 = vdwg.mxu0
    %118 = vmatpush.msra.mxu0 %v48
    %119 = vmatpush.msra.mxu0 %v47
    %120 = vmatpush.msra.mxu0 %v46
    %121 = vmatpush.msra.mxu0 %v45
    %122 = vmatpush.msra.mxu0 %v44
    %123 = vmatpush.msra.mxu0 %v43
    %124 = vmatpush.msra.mxu0 %v42
    %125 = vmatpush.msra.mxu0 %v41
    %126 = vmatpush.msra.mxu0 %v40
    %127 = vmatpush.msra.mxu0 %v39
    %128 = vmatpush.msra.mxu0 %v38
    %129 = vmatpush.msra.mxu0 %v37
    %130 = vmatpush.msra.mxu0 %v36
    %131 = vmatpush.msra.mxu0 %v35
    %132 = vmatpush.msra.mxu0 %v34
    %133 = vmatpush.msra.mxu0 %v33
    %134 = vmatmul.f32.gmra.mxu0 %v91
    %v135 = vpop.f32.mrf.mxu0
    %v136 = vadd.f32 %v116, %v135
    %137 = vdwg.mxu0
    %138 = vmatpush.msra.mxu0 %v64
    %139 = vmatpush.msra.mxu0 %v63
    %140 = vmatpush.msra.mxu0 %v62
    %141 = vmatpush.msra.mxu0 %v61
    %142 = vmatpush.msra.mxu0 %v60
    %143 = vmatpush.msra.mxu0 %v59
    %144 = vmatpush.msra.mxu0 %v58
    %145 = vmatpush.msra.mxu0 %v57
    %146 = vmatpush.msra.mxu0 %v56
    %147 = vmatpush.msra.mxu0 %v55
    %148 = vmatpush.msra.mxu0 %v54
    %149 = vmatpush.msra.mxu0 %v53
    %150 = vmatpush.msra.mxu0 %v52
    %151 = vmatpush.msra.mxu0 %v51
    %152 = vmatpush.msra.mxu0 %v50
    %153 = vmatpush.msra.mxu0 %v49
    %154 = vmatmul.f32.gmra.mxu0 %v92
    %v155 = vpop.f32.mrf.mxu0
    %v156 = vadd.f32 %v136, %v155
    %157 = vdwg.mxu0
    %158 = vmatpush.msra.mxu0 %v80
    %159 = vmatpush.msra.mxu0 %v79
    %160 = vmatpush.msra.mxu0 %v78
    %161 = vmatpush.msra.mxu0 %v77
    %162 = vmatpush.msra.mxu0 %v76
    %163 = vmatpush.msra.mxu0 %v75
    %164 = vmatpush.msra.mxu0 %v74
    %165 = vmatpush.msra.mxu0 %v73
    %166 = vmatpush.msra.mxu0 %v72
    %167 = vmatpush.msra.mxu0 %v71
    %168 = vmatpush.msra.mxu0 %v70
    %169 = vmatpush.msra.mxu0 %v69
    %170 = vmatpush.msra.mxu0 %v68
    %171 = vmatpush.msra.mxu0 %v67
    %172 = vmatpush.msra.mxu0 %v66
    %173 = vmatpush.msra.mxu0 %v65
    %174 = vmatmul.f32.gmra.mxu0 %v93
    %v175 = vpop.f32.mrf.mxu0
    %v176 = vadd.f32 %v156, %v175
    %177 = vdwg.mxu0
    %178 = vst [vmem:[#allocation2] sm:$0xf] %v176
    // Predicated region
    $region14: #{conv1d_encoder.3} parent=1 // pred_check
      _
    $region15: #{conv1d_encoder.3} parent=1 // pred_check_branch
      %180 = sbr.rel (0) target = $region17
    $region16: #{conv1d_encoder.3} parent=1 // pred_region
      %182 = vsyncadd [#allocation3], 0
      %s184 = sshll.u32 [#allocation2], 4
      %s185 = int_to_ptr.vmem [resolvable:$true] %s184
      %s186 = sshll.u32 %s3, 4
      %s187 = int_to_ptr.hbm [resolvable:$true] %s186
      %189 = dma.vmem_to_hbm [thread:$0]  %s185, 64, %s187, [#allocation3]
    $region17: #{conv1d_encoder.3} parent=1 // pred_fallthru
      _
    // Predicated region
    $region18: #{conv1d_encoder.3} parent=1 // pred_check
      _
    $region19: #{conv1d_encoder.3} parent=1 // pred_check_branch
      %191 = sbr.rel (0) target = $region21
    $region20: #{conv1d_encoder.3} parent=1 // pred_region
      %193 = dma.done [#allocation3], 64
    $region21: #{conv1d_encoder.3} parent=1 // pred_fallthru
      _
    %194 = vsyncpa [#allocation3], 1

// kernel: conv1d_encoder.2
$region0: #{conv1d_encoder.2}
  #allocation0 [shape = 'u32[]', space=smem, size = 0x4, offset = 0x4, fixed_abs, tag = 'smem constant byte address 0x4 - core index']
  #allocation1 [shape = 'u32[72,128]{1,0:T(1,128)}', space=vmem, size = 0x9000, scoped, tag = 'internal scratch']
  #allocation2 [shape = 'f32[576,16]{1,0:T(8,128)}', space=vmem, size = 0x48000, scoped, tag = 'scratch operand']
  #allocation3 [shape = 'f32[320,16]{1,0:T(8,128)}', space=vmem, size = 0x28000, scoped, tag = 'scratch operand']
  %s0 = inlined_call_operand.vmem [shape: f32[512,5], index: 0, kind: input, shape index: {}]
  %s1 = inlined_call_operand.vmem [shape: f32[5,16], index: 1, kind: input, shape index: {}]
  %s2 = inlined_call_operand.vmem [shape: f32[1,16], index: 2, kind: input, shape index: {}]
  %s3 = inlined_call_operand.vmem [shape: f32[80,16], index: 3, kind: input, shape index: {}]
  %s4 = inlined_call_operand.vmem [shape: f32[1,16], index: 4, kind: input, shape index: {}]
  %s5 = inlined_call_operand.vmem [shape: f32[80,16], index: 5, kind: input, shape index: {}]
  %s6 = inlined_call_operand.vmem [shape: f32[1,16], index: 6, kind: input, shape index: {}]
  %s7 = inlined_call_operand.vmem [shape: f32[128,16], index: 7, kind: output, shape index: {}]
  %s8 = sld [smem:[#allocation0]]
  $region38: #{conv1d_encoder.2} parent=0
    _
  %s10 = ssub.s32 1, %s8
  %s11 = scalar_select 0, %s10, %s8
  // Predicated region
  $region2: #{conv1d_encoder.2} parent=0 // pred_check
    _
  $region3: #{conv1d_encoder.2} parent=0 // pred_check_branch
    %13 = sbr.rel (0) target = $region5
  $region4: #{conv1d_encoder.2} parent=0 // pred_region
    _
  $region5: #{conv1d_encoder.2} parent=0 // pred_fallthru
    _
  // Predicated region
  $region6: #{conv1d_encoder.2} parent=0 // pred_check
    _
  $region7: #{conv1d_encoder.2} parent=0 // pred_check_branch
    %15 = sbr.rel (0) target = $region9
  $region8: #{conv1d_encoder.2} parent=0 // pred_region
    _
  $region9: #{conv1d_encoder.2} parent=0 // pred_fallthru
    _
  // Predicated region
  $region10: #{conv1d_encoder.2} parent=0 // pred_check
    _
  $region11: #{conv1d_encoder.2} parent=0 // pred_check_branch
    %17 = sbr.rel (0) target = $region13
  $region12: #{conv1d_encoder.2} parent=0 // pred_region
    _
  $region13: #{conv1d_encoder.2} parent=0 // pred_fallthru
    _
  // Predicated region
  $region14: #{conv1d_encoder.2} parent=0 // pred_check
    _
  $region15: #{conv1d_encoder.2} parent=0 // pred_check_branch
    %19 = sbr.rel (0) target = $region17
  $region16: #{conv1d_encoder.2} parent=0 // pred_region
    _
  $region17: #{conv1d_encoder.2} parent=0 // pred_fallthru
    _
  // Predicated region
  $region18: #{conv1d_encoder.2} parent=0 // pred_check
    _
  $region19: #{conv1d_encoder.2} parent=0 // pred_check_branch
    %21 = sbr.rel (0) target = $region21
  $region20: #{conv1d_encoder.2} parent=0 // pred_region
    _
  $region21: #{conv1d_encoder.2} parent=0 // pred_fallthru
    _
  // Predicated region
  $region22: #{conv1d_encoder.2} parent=0 // pred_check
    _
  $region23: #{conv1d_encoder.2} parent=0 // pred_check_branch
    %23 = sbr.rel (0) target = $region25
  $region24: #{conv1d_encoder.2} parent=0 // pred_region
    _
  $region25: #{conv1d_encoder.2} parent=0 // pred_fallthru
    _
  // Predicated region
  $region26: #{conv1d_encoder.2} parent=0 // pred_check
    _
  $region27: #{conv1d_encoder.2} parent=0 // pred_check_branch
    %25 = sbr.rel (0) target = $region29
  $region28: #{conv1d_encoder.2} parent=0 // pred_region
    _
  $region29: #{conv1d_encoder.2} parent=0 // pred_fallthru
    _
  %v26 = vld [vmem:[%s0] sm:$0xff]
  %v27 = vld [vmem:[%s0 + $0x8] sm:$0xff]
  %v28 = vld [vmem:[%s0 + $0x10] sm:$0xff]
  %v29 = vld [vmem:[%s0 + $0x18] sm:$0xff]
  %v30 = vld [vmem:[%s0 + $0x20] sm:$0xff]
  %v31 = vld [vmem:[%s0 + $0x28] sm:$0xff]
  %v32 = vld [vmem:[%s0 + $0x30] sm:$0xff]
  %v33 = vld [vmem:[%s0 + $0x38] sm:$0xff]
  %v34 = vld [vmem:[%s0 + $0x40] sm:$0xff]
  %v35 = vld [vmem:[%s0 + $0x48] sm:$0xff]
  %v36 = vld [vmem:[%s0 + $0x50] sm:$0xff]
  %v37 = vld [vmem:[%s0 + $0x58] sm:$0xff]
  %v38 = vld [vmem:[%s0 + $0x60] sm:$0xff]
  %v39 = vld [vmem:[%s0 + $0x68] sm:$0xff]
  %v40 = vld [vmem:[%s0 + $0x70] sm:$0xff]
  %v41 = vld [vmem:[%s0 + $0x78] sm:$0xff]
  %v42 = vld [vmem:[%s0 + $0x80] sm:$0xff]
  %v43 = vld [vmem:[%s0 + $0x88] sm:$0xff]
  %v44 = vld [vmem:[%s0 + $0x90] sm:$0xff]
  %v45 = vld [vmem:[%s0 + $0x98] sm:$0xff]
  %v46 = vld [vmem:[%s0 + $0xa0] sm:$0xff]
  %v47 = vld [vmem:[%s0 + $0xa8] sm:$0xff]
  %v48 = vld [vmem:[%s0 + $0xb0] sm:$0xff]
  %v49 = vld [vmem:[%s0 + $0xb8] sm:$0xff]
  %v50 = vld [vmem:[%s0 + $0xc0] sm:$0xff]
  %v51 = vld [vmem:[%s0 + $0xc8] sm:$0xff]
  %v52 = vld [vmem:[%s0 + $0xd0] sm:$0xff]
  %v53 = vld [vmem:[%s0 + $0xd8] sm:$0xff]
  %v54 = vld [vmem:[%s0 + $0xe0] sm:$0xff]
  %v55 = vld [vmem:[%s0 + $0xe8] sm:$0xff]
  %v56 = vld [vmem:[%s0 + $0xf0] sm:$0xff]
  %v57 = vld [vmem:[%s0 + $0xf8] sm:$0xff]
  %v58 = vld [vmem:[%s0 + $0x100] sm:$0xff]
  %v59 = vld [vmem:[%s0 + $0x108] sm:$0xff]
  %v60 = vld [vmem:[%s0 + $0x110] sm:$0xff]
  %v61 = vld [vmem:[%s0 + $0x118] sm:$0xff]
  %v62 = vld [vmem:[%s0 + $0x120] sm:$0xff]
  %v63 = vld [vmem:[%s0 + $0x128] sm:$0xff]
  %v64 = vld [vmem:[%s0 + $0x130] sm:$0xff]
  %v65 = vld [vmem:[%s0 + $0x138] sm:$0xff]
  %v66 = vld [vmem:[%s0 + $0x140] sm:$0xff]
  %v67 = vld [vmem:[%s0 + $0x148] sm:$0xff]
  %v68 = vld [vmem:[%s0 + $0x150] sm:$0xff]
  %v69 = vld [vmem:[%s0 + $0x158] sm:$0xff]
  %v70 = vld [vmem:[%s0 + $0x160] sm:$0xff]
  %v71 = vld [vmem:[%s0 + $0x168] sm:$0xff]
  %v72 = vld [vmem:[%s0 + $0x170] sm:$0xff]
  %v73 = vld [vmem:[%s0 + $0x178] sm:$0xff]
  %v74 = vld [vmem:[%s0 + $0x180] sm:$0xff]
  %v75 = vld [vmem:[%s0 + $0x188] sm:$0xff]
  %v76 = vld [vmem:[%s0 + $0x190] sm:$0xff]
  %v77 = vld [vmem:[%s0 + $0x198] sm:$0xff]
  %v78 = vld [vmem:[%s0 + $0x1a0] sm:$0xff]
  %v79 = vld [vmem:[%s0 + $0x1a8] sm:$0xff]
  %v80 = vld [vmem:[%s0 + $0x1b0] sm:$0xff]
  %v81 = vld [vmem:[%s0 + $0x1b8] sm:$0xff]
  %v82 = vld [vmem:[%s0 + $0x1c0] sm:$0xff]
  %v83 = vld [vmem:[%s0 + $0x1c8] sm:$0xff]
  %v84 = vld [vmem:[%s0 + $0x1d0] sm:$0xff]
  %v85 = vld [vmem:[%s0 + $0x1d8] sm:$0xff]
  %v86 = vld [vmem:[%s0 + $0x1e0] sm:$0xff]
  %v87 = vld [vmem:[%s0 + $0x1e8] sm:$0xff]
  %v88 = vld [vmem:[%s0 + $0x1f0] sm:$0xff]
  %v89 = vld [vmem:[%s0 + $0x1f8] sm:$0xff]
  %v90 = vld [vmem:[%s1] sm:$0x1f]
  %v91 = vld [vmem:[%s2] sm:$0x1]
  %v93 = vperm.slane %v91, 0
  %vm95 = vcmask 39936
  %v97 = vsel %vm95, %v26, 0
  %v100 = vsel %vm95, %v27, 0
  %v103 = vsel %vm95, %v28, 0
  %v106 = vsel %vm95, %v29, 0
  %v109 = vsel %vm95, %v30, 0
  %v112 = vsel %vm95, %v31, 0
  %v115 = vsel %vm95, %v32, 0
  %v118 = vsel %vm95, %v33, 0
  %v121 = vsel %vm95, %v34, 0
  %v124 = vsel %vm95, %v35, 0
  %v127 = vsel %vm95, %v36, 0
  %v130 = vsel %vm95, %v37, 0
  %v133 = vsel %vm95, %v38, 0
  %v136 = vsel %vm95, %v39, 0
  %v139 = vsel %vm95, %v40, 0
  %v142 = vsel %vm95, %v41, 0
  %v145 = vsel %vm95, %v42, 0
  %v148 = vsel %vm95, %v43, 0
  %v151 = vsel %vm95, %v44, 0
  %v154 = vsel %vm95, %v45, 0
  %v157 = vsel %vm95, %v46, 0
  %v160 = vsel %vm95, %v47, 0
  %v163 = vsel %vm95, %v48, 0
  %v166 = vsel %vm95, %v49, 0
  %v169 = vsel %vm95, %v50, 0
  %v172 = vsel %vm95, %v51, 0
  %v175 = vsel %vm95, %v52, 0
  %v178 = vsel %vm95, %v53, 0
  %v181 = vsel %vm95, %v54, 0
  %v184 = vsel %vm95, %v55, 0
  %v187 = vsel %vm95, %v56, 0
  %v190 = vsel %vm95, %v57, 0
  %v193 = vsel %vm95, %v58, 0
  %v196 = vsel %vm95, %v59, 0
  %v199 = vsel %vm95, %v60, 0
  %v202 = vsel %vm95, %v61, 0
  %v205 = vsel %vm95, %v62, 0
  %v208 = vsel %vm95, %v63, 0
  %v211 = vsel %vm95, %v64, 0
  %v214 = vsel %vm95, %v65, 0
  %v217 = vsel %vm95, %v66, 0
  %v220 = vsel %vm95, %v67, 0
  %v223 = vsel %vm95, %v68, 0
  %v226 = vsel %vm95, %v69, 0
  %v229 = vsel %vm95, %v70, 0
  %v232 = vsel %vm95, %v71, 0
  %v235 = vsel %vm95, %v72, 0
  %v238 = vsel %vm95, %v73, 0
  %v241 = vsel %vm95, %v74, 0
  %v244 = vsel %vm95, %v75, 0
  %v247 = vsel %vm95, %v76, 0
  %v250 = vsel %vm95, %v77, 0
  %v253 = vsel %vm95, %v78, 0
  %v256 = vsel %vm95, %v79, 0
  %v259 = vsel %vm95, %v80, 0
  %v262 = vsel %vm95, %v81, 0
  %v265 = vsel %vm95, %v82, 0
  %v268 = vsel %vm95, %v83, 0
  %v271 = vsel %vm95, %v84, 0
  %v274 = vsel %vm95, %v85, 0
  %v277 = vsel %vm95, %v86, 0
  %v280 = vsel %vm95, %v87, 0
  %v283 = vsel %vm95, %v88, 0
  %v286 = vsel %vm95, %v89, 0
  %vm288 = vcmask 1044480
  %v290 = vsel %vm288, %v90, 0
  %292 = vmatpush.msra.mxu0 0.0
  %293 = vmatpush.msra.mxu0 0.0
  %294 = vmatpush.msra.mxu0 0.0
  %295 = vmatpush.msra.mxu0 0.0
  %296 = vmatpush.msra.mxu0 0.0
  %297 = vmatpush.msra.mxu0 0.0
  %298 = vmatpush.msra.mxu0 0.0
  %299 = vmatpush.msra.mxu0 0.0
  %300 = vmatpush.msra.mxu0 0.0
  %301 = vmatpush.msra.mxu0 0.0
  %302 = vmatpush.msra.mxu0 0.0
  %303 = vmatpush.msra.mxu0 0.0
  %304 = vmatpush.msra.mxu0 0.0
  %305 = vmatpush.msra.mxu0 0.0
  %306 = vmatpush.msra.mxu0 0.0
  %307 = vmatpush.msra.mxu0 %v290
  %308 = vmatmul.f32.gmra.mxu0 %v97
  %v309 = vpop.f32.mrf.mxu0
  %v310 = vadd.f32 %v93, %v309
  %311 = vmatmul.f32.gmra.mxu0 %v100
  %v312 = vpop.f32.mrf.mxu0
  %v313 = vadd.f32 %v93, %v312
  %314 = vmatmul.f32.gmra.mxu0 %v103
  %v315 = vpop.f32.mrf.mxu0
  %v316 = vadd.f32 %v93, %v315
  %317 = vmatmul.f32.gmra.mxu0 %v106
  %v318 = vpop.f32.mrf.mxu0
  %v319 = vadd.f32 %v93, %v318
  %320 = vmatmul.f32.gmra.mxu0 %v109
  %v321 = vpop.f32.mrf.mxu0
  %v322 = vadd.f32 %v93, %v321
  %323 = vmatmul.f32.gmra.mxu0 %v112
  %v324 = vpop.f32.mrf.mxu0
  %v325 = vadd.f32 %v93, %v324
  %326 = vmatmul.f32.gmra.mxu0 %v115
  %v327 = vpop.f32.mrf.mxu0
  %v328 = vadd.f32 %v93, %v327
  %329 = vmatmul.f32.gmra.mxu0 %v118
  %v330 = vpop.f32.mrf.mxu0
  %v331 = vadd.f32 %v93, %v330
  %332 = vmatmul.f32.gmra.mxu0 %v121
  %v333 = vpop.f32.mrf.mxu0
  %v334 = vadd.f32 %v93, %v333
  %335 = vmatmul.f32.gmra.mxu0 %v124
  %v336 = vpop.f32.mrf.mxu0
  %v337 = vadd.f32 %v93, %v336
  %338 = vmatmul.f32.gmra.mxu0 %v127
  %v339 = vpop.f32.mrf.mxu0
  %v340 = vadd.f32 %v93, %v339
  %341 = vmatmul.f32.gmra.mxu0 %v130
  %v342 = vpop.f32.mrf.mxu0
  %v343 = vadd.f32 %v93, %v342
  %344 = vmatmul.f32.gmra.mxu0 %v133
  %v345 = vpop.f32.mrf.mxu0
  %v346 = vadd.f32 %v93, %v345
  %347 = vmatmul.f32.gmra.mxu0 %v136
  %v348 = vpop.f32.mrf.mxu0
  %v349 = vadd.f32 %v93, %v348
  %350 = vmatmul.f32.gmra.mxu0 %v139
  %v351 = vpop.f32.mrf.mxu0
  %v352 = vadd.f32 %v93, %v351
  %353 = vmatmul.f32.gmra.mxu0 %v142
  %v354 = vpop.f32.mrf.mxu0
  %v355 = vadd.f32 %v93, %v354
  %356 = vmatmul.f32.gmra.mxu0 %v145
  %v357 = vpop.f32.mrf.mxu0
  %v358 = vadd.f32 %v93, %v357
  %359 = vmatmul.f32.gmra.mxu0 %v148
  %v360 = vpop.f32.mrf.mxu0
  %v361 = vadd.f32 %v93, %v360
  %362 = vmatmul.f32.gmra.mxu0 %v151
  %v363 = vpop.f32.mrf.mxu0
  %v364 = vadd.f32 %v93, %v363
  %365 = vmatmul.f32.gmra.mxu0 %v154
  %v366 = vpop.f32.mrf.mxu0
  %v367 = vadd.f32 %v93, %v366
  %368 = vmatmul.f32.gmra.mxu0 %v157
  %v369 = vpop.f32.mrf.mxu0
  %v370 = vadd.f32 %v93, %v369
  %371 = vmatmul.f32.gmra.mxu0 %v160
  %v372 = vpop.f32.mrf.mxu0
  %v373 = vadd.f32 %v93, %v372
  %374 = vmatmul.f32.gmra.mxu0 %v163
  %v375 = vpop.f32.mrf.mxu0
  %v376 = vadd.f32 %v93, %v375
  %377 = vmatmul.f32.gmra.mxu0 %v166
  %v378 = vpop.f32.mrf.mxu0
  %v379 = vadd.f32 %v93, %v378
  %380 = vmatmul.f32.gmra.mxu0 %v169
  %v381 = vpop.f32.mrf.mxu0
  %v382 = vadd.f32 %v93, %v381
  %383 = vmatmul.f32.gmra.mxu0 %v172
  %v384 = vpop.f32.mrf.mxu0
  %v385 = vadd.f32 %v93, %v384
  %386 = vmatmul.f32.gmra.mxu0 %v175
  %v387 = vpop.f32.mrf.mxu0
  %v388 = vadd.f32 %v93, %v387
  %389 = vmatmul.f32.gmra.mxu0 %v178
  %v390 = vpop.f32.mrf.mxu0
  %v391 = vadd.f32 %v93, %v390
  %392 = vmatmul.f32.gmra.mxu0 %v181
  %v393 = vpop.f32.mrf.mxu0
  %v394 = vadd.f32 %v93, %v393
  %395 = vmatmul.f32.gmra.mxu0 %v184
  %v396 = vpop.f32.mrf.mxu0
  %v397 = vadd.f32 %v93, %v396
  %398 = vmatmul.f32.gmra.mxu0 %v187
  %v399 = vpop.f32.mrf.mxu0
  %v400 = vadd.f32 %v93, %v399
  %401 = vmatmul.f32.gmra.mxu0 %v190
  %v402 = vpop.f32.mrf.mxu0
  %v403 = vadd.f32 %v93, %v402
  %404 = vmatmul.f32.gmra.mxu0 %v193
  %v405 = vpop.f32.mrf.mxu0
  %v406 = vadd.f32 %v93, %v405
  %407 = vmatmul.f32.gmra.mxu0 %v196
  %v408 = vpop.f32.mrf.mxu0
  %v409 = vadd.f32 %v93, %v408
  %410 = vmatmul.f32.gmra.mxu0 %v199
  %v411 = vpop.f32.mrf.mxu0
  %v412 = vadd.f32 %v93, %v411
  %413 = vmatmul.f32.gmra.mxu0 %v202
  %v414 = vpop.f32.mrf.mxu0
  %v415 = vadd.f32 %v93, %v414
  %416 = vmatmul.f32.gmra.mxu0 %v205
  %v417 = vpop.f32.mrf.mxu0
  %v418 = vadd.f32 %v93, %v417
  %419 = vmatmul.f32.gmra.mxu0 %v208
  %v420 = vpop.f32.mrf.mxu0
  %v421 = vadd.f32 %v93, %v420
  %422 = vmatmul.f32.gmra.mxu0 %v211
  %v423 = vpop.f32.mrf.mxu0
  %v424 = vadd.f32 %v93, %v423
  %425 = vmatmul.f32.gmra.mxu0 %v214
  %v426 = vpop.f32.mrf.mxu0
  %v427 = vadd.f32 %v93, %v426
  %428 = vmatmul.f32.gmra.mxu0 %v217
  %v429 = vpop.f32.mrf.mxu0
  %v430 = vadd.f32 %v93, %v429
  %431 = vmatmul.f32.gmra.mxu0 %v220
  %v432 = vpop.f32.mrf.mxu0
  %v433 = vadd.f32 %v93, %v432
  %434 = vmatmul.f32.gmra.mxu0 %v223
  %v435 = vpop.f32.mrf.mxu0
  %v436 = vadd.f32 %v93, %v435
  %437 = vmatmul.f32.gmra.mxu0 %v226
  %v438 = vpop.f32.mrf.mxu0
  %v439 = vadd.f32 %v93, %v438
  %440 = vmatmul.f32.gmra.mxu0 %v229
  %v441 = vpop.f32.mrf.mxu0
  %v442 = vadd.f32 %v93, %v441
  %443 = vmatmul.f32.gmra.mxu0 %v232
  %v444 = vpop.f32.mrf.mxu0
  %v445 = vadd.f32 %v93, %v444
  %446 = vmatmul.f32.gmra.mxu0 %v235
  %v447 = vpop.f32.mrf.mxu0
  %v448 = vadd.f32 %v93, %v447
  %449 = vmatmul.f32.gmra.mxu0 %v238
  %v450 = vpop.f32.mrf.mxu0
  %v451 = vadd.f32 %v93, %v450
  %452 = vmatmul.f32.gmra.mxu0 %v241
  %v453 = vpop.f32.mrf.mxu0
  %v454 = vadd.f32 %v93, %v453
  %455 = vmatmul.f32.gmra.mxu0 %v244
  %v456 = vpop.f32.mrf.mxu0
  %v457 = vadd.f32 %v93, %v456
  %458 = vmatmul.f32.gmra.mxu0 %v247
  %v459 = vpop.f32.mrf.mxu0
  %v460 = vadd.f32 %v93, %v459
  %461 = vmatmul.f32.gmra.mxu0 %v250
  %v462 = vpop.f32.mrf.mxu0
  %v463 = vadd.f32 %v93, %v462
  %464 = vmatmul.f32.gmra.mxu0 %v253
  %v465 = vpop.f32.mrf.mxu0
  %v466 = vadd.f32 %v93, %v465
  %467 = vmatmul.f32.gmra.mxu0 %v256
  %v468 = vpop.f32.mrf.mxu0
  %v469 = vadd.f32 %v93, %v468
  %470 = vmatmul.f32.gmra.mxu0 %v259
  %v471 = vpop.f32.mrf.mxu0
  %v472 = vadd.f32 %v93, %v471
  %473 = vmatmul.f32.gmra.mxu0 %v262
  %v474 = vpop.f32.mrf.mxu0
  %v475 = vadd.f32 %v93, %v474
  %476 = vmatmul.f32.gmra.mxu0 %v265
  %v477 = vpop.f32.mrf.mxu0
  %v478 = vadd.f32 %v93, %v477
  %479 = vmatmul.f32.gmra.mxu0 %v268
  %v480 = vpop.f32.mrf.mxu0
  %v481 = vadd.f32 %v93, %v480
  %482 = vmatmul.f32.gmra.mxu0 %v271
  %v483 = vpop.f32.mrf.mxu0
  %v484 = vadd.f32 %v93, %v483
  %485 = vmatmul.f32.gmra.mxu0 %v274
  %v486 = vpop.f32.mrf.mxu0
  %v487 = vadd.f32 %v93, %v486
  %488 = vmatmul.f32.gmra.mxu0 %v277
  %v489 = vpop.f32.mrf.mxu0
  %v490 = vadd.f32 %v93, %v489
  %491 = vmatmul.f32.gmra.mxu0 %v280
  %v492 = vpop.f32.mrf.mxu0
  %v493 = vadd.f32 %v93, %v492
  %494 = vmatmul.f32.gmra.mxu0 %v283
  %v495 = vpop.f32.mrf.mxu0
  %v496 = vadd.f32 %v93, %v495
  %497 = vmatmul.f32.gmra.mxu0 %v286
  %v498 = vpop.f32.mrf.mxu0
  %v499 = vadd.f32 %v93, %v498
  %500 = vdwg.mxu0
  %v501 = vmax.f32 %v310, 0.0
  %v502 = vmax.f32 %v313, 0.0
  %v503 = vmax.f32 %v316, 0.0
  %v504 = vmax.f32 %v319, 0.0
  %v505 = vmax.f32 %v322, 0.0
  %v506 = vmax.f32 %v325, 0.0
  %v507 = vmax.f32 %v328, 0.0
  %v508 = vmax.f32 %v331, 0.0
  %v509 = vmax.f32 %v334, 0.0
  %v510 = vmax.f32 %v337, 0.0
  %v511 = vmax.f32 %v340, 0.0
  %v512 = vmax.f32 %v343, 0.0
  %v513 = vmax.f32 %v346, 0.0
  %v514 = vmax.f32 %v349, 0.0
  %v515 = vmax.f32 %v352, 0.0
  %v516 = vmax.f32 %v355, 0.0
  %v517 = vmax.f32 %v358, 0.0
  %v518 = vmax.f32 %v361, 0.0
  %v519 = vmax.f32 %v364, 0.0
  %v520 = vmax.f32 %v367, 0.0
  %v521 = vmax.f32 %v370, 0.0
  %v522 = vmax.f32 %v373, 0.0
  %v523 = vmax.f32 %v376, 0.0
  %v524 = vmax.f32 %v379, 0.0
  %v525 = vmax.f32 %v382, 0.0
  %v526 = vmax.f32 %v385, 0.0
  %v527 = vmax.f32 %v388, 0.0
  %v528 = vmax.f32 %v391, 0.0
  %v529 = vmax.f32 %v394, 0.0
  %v530 = vmax.f32 %v397, 0.0
  %v531 = vmax.f32 %v400, 0.0
  %v532 = vmax.f32 %v403, 0.0
  %v533 = vmax.f32 %v406, 0.0
  %v534 = vmax.f32 %v409, 0.0
  %v535 = vmax.f32 %v412, 0.0
  %v536 = vmax.f32 %v415, 0.0
  %v537 = vmax.f32 %v418, 0.0
  %v538 = vmax.f32 %v421, 0.0
  %v539 = vmax.f32 %v424, 0.0
  %v540 = vmax.f32 %v427, 0.0
  %v541 = vmax.f32 %v430, 0.0
  %v542 = vmax.f32 %v433, 0.0
  %v543 = vmax.f32 %v436, 0.0
  %v544 = vmax.f32 %v439, 0.0
  %v545 = vmax.f32 %v442, 0.0
  %v546 = vmax.f32 %v445, 0.0
  %v547 = vmax.f32 %v448, 0.0
  %v548 = vmax.f32 %v451, 0.0
  %v549 = vmax.f32 %v454, 0.0
  %v550 = vmax.f32 %v457, 0.0
  %v551 = vmax.f32 %v460, 0.0
  %v552 = vmax.f32 %v463, 0.0
  %v553 = vmax.f32 %v466, 0.0
  %v554 = vmax.f32 %v469, 0.0
  %v555 = vmax.f32 %v472, 0.0
  %v556 = vmax.f32 %v475, 0.0
  %v557 = vmax.f32 %v478, 0.0
  %v558 = vmax.f32 %v481, 0.0
  %v559 = vmax.f32 %v484, 0.0
  %v560 = vmax.f32 %v487, 0.0
  %v561 = vmax.f32 %v490, 0.0
  %v562 = vmax.f32 %v493, 0.0
  %v563 = vmax.f32 %v496, 0.0
  %v564 = vmax.f32 %v499, 0.0
  %vm565 = vcmask 123904
  %566 = vst.msk [vmem:[#allocation2 + $0x6] sm:$0x3] %vm565, 0.0
  %567 = vst.msk [vmem:[#allocation2 + $0x88] sm:$0x3] %vm565, 0.0
  %vm568 = vcmask 130048
  %569 = vst.msk [vmem:[#allocation2 + $0x8] sm:$0xff] %vm568, %v501
  %570 = vst.msk [vmem:[#allocation2 + $0x10] sm:$0xff] %vm568, %v502
  %571 = vst.msk [vmem:[#allocation2 + $0x18] sm:$0xff] %vm568, %v503
  %572 = vst.msk [vmem:[#allocation2 + $0x20] sm:$0xff] %vm568, %v504
  %573 = vst.msk [vmem:[#allocation2 + $0x28] sm:$0xff] %vm568, %v505
  %574 = vst.msk [vmem:[#allocation2 + $0x30] sm:$0xff] %vm568, %v506
  %575 = vst.msk [vmem:[#allocation2 + $0x38] sm:$0xff] %vm568, %v507
  %576 = vst.msk [vmem:[#allocation2 + $0x40] sm:$0xff] %vm568, %v508
  %577 = vst.msk [vmem:[#allocation2 + $0x48] sm:$0xff] %vm568, %v509
  %578 = vst.msk [vmem:[#allocation2 + $0x50] sm:$0xff] %vm568, %v510
  %579 = vst.msk [vmem:[#allocation2 + $0x58] sm:$0xff] %vm568, %v511
  %580 = vst.msk [vmem:[#allocation2 + $0x60] sm:$0xff] %vm568, %v512
  %581 = vst.msk [vmem:[#allocation2 + $0x68] sm:$0xff] %vm568, %v513
  %582 = vst.msk [vmem:[#allocation2 + $0x70] sm:$0xff] %vm568, %v514
  %583 = vst.msk [vmem:[#allocation2 + $0x78] sm:$0xff] %vm568, %v515
  %584 = vst.msk [vmem:[#allocation2 + $0x80] sm:$0xff] %vm568, %v516
  %585 = vst.msk [vmem:[#allocation2 + $0x96] sm:$0x3] %vm565, 0.0
  %586 = vst.msk [vmem:[#allocation2 + $0x118] sm:$0x3] %vm565, 0.0
  %587 = vst.msk [vmem:[#allocation2 + $0x98] sm:$0xff] %vm568, %v517
  %588 = vst.msk [vmem:[#allocation2 + $0xa0] sm:$0xff] %vm568, %v518
  %589 = vst.msk [vmem:[#allocation2 + $0xa8] sm:$0xff] %vm568, %v519
  %590 = vst.msk [vmem:[#allocation2 + $0xb0] sm:$0xff] %vm568, %v520
  %591 = vst.msk [vmem:[#allocation2 + $0xb8] sm:$0xff] %vm568, %v521
  %592 = vst.msk [vmem:[#allocation2 + $0xc0] sm:$0xff] %vm568, %v522
  %593 = vst.msk [vmem:[#allocation2 + $0xc8] sm:$0xff] %vm568, %v523
  %594 = vst.msk [vmem:[#allocation2 + $0xd0] sm:$0xff] %vm568, %v524
  %595 = vst.msk [vmem:[#allocation2 + $0xd8] sm:$0xff] %vm568, %v525
  %596 = vst.msk [vmem:[#allocation2 + $0xe0] sm:$0xff] %vm568, %v526
  %597 = vst.msk [vmem:[#allocation2 + $0xe8] sm:$0xff] %vm568, %v527
  %598 = vst.msk [vmem:[#allocation2 + $0xf0] sm:$0xff] %vm568, %v528
  %599 = vst.msk [vmem:[#allocation2 + $0xf8] sm:$0xff] %vm568, %v529
  %600 = vst.msk [vmem:[#allocation2 + $0x100] sm:$0xff] %vm568, %v530
  %601 = vst.msk [vmem:[#allocation2 + $0x108] sm:$0xff] %vm568, %v531
  %602 = vst.msk [vmem:[#allocation2 + $0x110] sm:$0xff] %vm568, %v532
  %603 = vst.msk [vmem:[#allocation2 + $0x126] sm:$0x3] %vm565, 0.0
  %604 = vst.msk [vmem:[#allocation2 + $0x1a8] sm:$0x3] %vm565, 0.0
  %605 = vst.msk [vmem:[#allocation2 + $0x128] sm:$0xff] %vm568, %v533
  %606 = vst.msk [vmem:[#allocation2 + $0x130] sm:$0xff] %vm568, %v534
  %607 = vst.msk [vmem:[#allocation2 + $0x138] sm:$0xff] %vm568, %v535
  %608 = vst.msk [vmem:[#allocation2 + $0x140] sm:$0xff] %vm568, %v536
  %609 = vst.msk [vmem:[#allocation2 + $0x148] sm:$0xff] %vm568, %v537
  %610 = vst.msk [vmem:[#allocation2 + $0x150] sm:$0xff] %vm568, %v538
  %611 = vst.msk [vmem:[#allocation2 + $0x158] sm:$0xff] %vm568, %v539
  %612 = vst.msk [vmem:[#allocation2 + $0x160] sm:$0xff] %vm568, %v540
  %613 = vst.msk [vmem:[#allocation2 + $0x168] sm:$0xff] %vm568, %v541
  %614 = vst.msk [vmem:[#allocation2 + $0x170] sm:$0xff] %vm568, %v542
  %615 = vst.msk [vmem:[#allocation2 + $0x178] sm:$0xff] %vm568, %v543
  %616 = vst.msk [vmem:[#allocation2 + $0x180] sm:$0xff] %vm568, %v544
  %617 = vst.msk [vmem:[#allocation2 + $0x188] sm:$0xff] %vm568, %v545
  %618 = vst.msk [vmem:[#allocation2 + $0x190] sm:$0xff] %vm568, %v546
  %619 = vst.msk [vmem:[#allocation2 + $0x198] sm:$0xff] %vm568, %v547
  %620 = vst.msk [vmem:[#allocation2 + $0x1a0] sm:$0xff] %vm568, %v548
  %621 = vst.msk [vmem:[#allocation2 + $0x1b6] sm:$0x3] %vm565, 0.0
  %622 = vst.msk [vmem:[#allocation2 + $0x238] sm:$0x3] %vm565, 0.0
  %623 = vst.msk [vmem:[#allocation2 + $0x1b8] sm:$0xff] %vm568, %v549
  %624 = vst.msk [vmem:[#allocation2 + $0x1c0] sm:$0xff] %vm568, %v550
  %625 = vst.msk [vmem:[#allocation2 + $0x1c8] sm:$0xff] %vm568, %v551
  %626 = vst.msk [vmem:[#allocation2 + $0x1d0] sm:$0xff] %vm568, %v552
  %627 = vst.msk [vmem:[#allocation2 + $0x1d8] sm:$0xff] %vm568, %v553
  %628 = vst.msk [vmem:[#allocation2 + $0x1e0] sm:$0xff] %vm568, %v554
  %629 = vst.msk [vmem:[#allocation2 + $0x1e8] sm:$0xff] %vm568, %v555
  %630 = vst.msk [vmem:[#allocation2 + $0x1f0] sm:$0xff] %vm568, %v556
  %631 = vst.msk [vmem:[#allocation2 + $0x1f8] sm:$0xff] %vm568, %v557
  %632 = vst.msk [vmem:[#allocation2 + $0x200] sm:$0xff] %vm568, %v558
  %633 = vst.msk [vmem:[#allocation2 + $0x208] sm:$0xff] %vm568, %v559
  %634 = vst.msk [vmem:[#allocation2 + $0x210] sm:$0xff] %vm568, %v560
  %635 = vst.msk [vmem:[#allocation2 + $0x218] sm:$0xff] %vm568, %v561
  %636 = vst.msk [vmem:[#allocation2 + $0x220] sm:$0xff] %vm568, %v562
  %637 = vst.msk [vmem:[#allocation2 + $0x228] sm:$0xff] %vm568, %v563
  %638 = vst.msk [vmem:[#allocation2 + $0x230] sm:$0xff] %vm568, %v564
  %s639 = scalar_lea.vmem [#allocation2], 6
  %v640 = vld [vmem:[%s639] ss:$2 sm:$0xff]
  %s641 = scalar_lea.vmem [#allocation2], 22
  %v642 = vld [vmem:[%s641] ss:$2 sm:$0xff]
  %s643 = scalar_lea.vmem [#allocation2], 38
  %v644 = vld [vmem:[%s643] ss:$2 sm:$0xff]
  %s645 = scalar_lea.vmem [#allocation2], 54
  %v646 = vld [vmem:[%s645] ss:$2 sm:$0xff]
  %s647 = scalar_lea.vmem [#allocation2], 70
  %v648 = vld [vmem:[%s647] ss:$2 sm:$0xff]
  %s649 = scalar_lea.vmem [#allocation2], 86
  %v650 = vld [vmem:[%s649] ss:$2 sm:$0xff]
  %s651 = scalar_lea.vmem [#allocation2], 102
  %v652 = vld [vmem:[%s651] ss:$2 sm:$0xff]
  %s653 = scalar_lea.vmem [#allocation2], 118
  %v654 = vld [vmem:[%s653] ss:$2 sm:$0xff]
  %s655 = scalar_lea.vmem [#allocation2], 150
  %v656 = vld [vmem:[%s655] ss:$2 sm:$0xff]
  %s657 = scalar_lea.vmem [#allocation2], 166
  %v658 = vld [vmem:[%s657] ss:$2 sm:$0xff]
  %s659 = scalar_lea.vmem [#allocation2], 182
  %v660 = vld [vmem:[%s659] ss:$2 sm:$0xff]
  %s661 = scalar_lea.vmem [#allocation2], 198
  %v662 = vld [vmem:[%s661] ss:$2 sm:$0xff]
  %s663 = scalar_lea.vmem [#allocation2], 214
  %v664 = vld [vmem:[%s663] ss:$2 sm:$0xff]
  %s665 = scalar_lea.vmem [#allocation2], 230
  %v666 = vld [vmem:[%s665] ss:$2 sm:$0xff]
  %s667 = scalar_lea.vmem [#allocation2], 246
  %v668 = vld [vmem:[%s667] ss:$2 sm:$0xff]
  %s669 = scalar_lea.vmem [#allocation2], 262
  %v670 = vld [vmem:[%s669] ss:$2 sm:$0xff]
  %s671 = scalar_lea.vmem [#allocation2], 294
  %v672 = vld [vmem:[%s671] ss:$2 sm:$0xff]
  %s673 = scalar_lea.vmem [#allocation2], 310
  %v674 = vld [vmem:[%s673] ss:$2 sm:$0xff]
  %s675 = scalar_lea.vmem [#allocation2], 326
  %v676 = vld [vmem:[%s675] ss:$2 sm:$0xff]
  %s677 = scalar_lea.vmem [#allocation2], 342
  %v678 = vld [vmem:[%s677] ss:$2 sm:$0xff]
  %s679 = scalar_lea.vmem [#allocation2], 358
  %v680 = vld [vmem:[%s679] ss:$2 sm:$0xff]
  %s681 = scalar_lea.vmem [#allocation2], 374
  %v682 = vld [vmem:[%s681] ss:$2 sm:$0xff]
  %s683 = scalar_lea.vmem [#allocation2], 390
  %v684 = vld [vmem:[%s683] ss:$2 sm:$0xff]
  %s685 = scalar_lea.vmem [#allocation2], 406
  %v686 = vld [vmem:[%s685] ss:$2 sm:$0xff]
  %s687 = scalar_lea.vmem [#allocation2], 438
  %v688 = vld [vmem:[%s687] ss:$2 sm:$0xff]
  %s689 = scalar_lea.vmem [#allocation2], 454
  %v690 = vld [vmem:[%s689] ss:$2 sm:$0xff]
  %s691 = scalar_lea.vmem [#allocation2], 470
  %v692 = vld [vmem:[%s691] ss:$2 sm:$0xff]
  %s693 = scalar_lea.vmem [#allocation2], 486
  %v694 = vld [vmem:[%s693] ss:$2 sm:$0xff]
  %s695 = scalar_lea.vmem [#allocation2], 502
  %v696 = vld [vmem:[%s695] ss:$2 sm:$0xff]
  %s697 = scalar_lea.vmem [#allocation2], 518
  %v698 = vld [vmem:[%s697] ss:$2 sm:$0xff]
  %s699 = scalar_lea.vmem [#allocation2], 534
  %v700 = vld [vmem:[%s699] ss:$2 sm:$0xff]
  %s701 = scalar_lea.vmem [#allocation2], 550
  %v702 = vld [vmem:[%s701] ss:$2 sm:$0xff]
  %s703 = scalar_lea.vmem [#allocation2], 7
  %v704 = vld [vmem:[%s703] ss:$2 sm:$0xff]
  %s705 = scalar_lea.vmem [#allocation2], 23
  %v706 = vld [vmem:[%s705] ss:$2 sm:$0xff]
  %s707 = scalar_lea.vmem [#allocation2], 39
  %v708 = vld [vmem:[%s707] ss:$2 sm:$0xff]
  %s709 = scalar_lea.vmem [#allocation2], 55
  %v710 = vld [vmem:[%s709] ss:$2 sm:$0xff]
  %s711 = scalar_lea.vmem [#allocation2], 71
  %v712 = vld [vmem:[%s711] ss:$2 sm:$0xff]
  %s713 = scalar_lea.vmem [#allocation2], 87
  %v714 = vld [vmem:[%s713] ss:$2 sm:$0xff]
  %s715 = scalar_lea.vmem [#allocation2], 103
  %v716 = vld [vmem:[%s715] ss:$2 sm:$0xff]
  %s717 = scalar_lea.vmem [#allocation2], 119
  %v718 = vld [vmem:[%s717] ss:$2 sm:$0xff]
  %s719 = scalar_lea.vmem [#allocation2], 151
  %v720 = vld [vmem:[%s719] ss:$2 sm:$0xff]
  %s721 = scalar_lea.vmem [#allocation2], 167
  %v722 = vld [vmem:[%s721] ss:$2 sm:$0xff]
  %s723 = scalar_lea.vmem [#allocation2], 183
  %v724 = vld [vmem:[%s723] ss:$2 sm:$0xff]
  %s725 = scalar_lea.vmem [#allocation2], 199
  %v726 = vld [vmem:[%s725] ss:$2 sm:$0xff]
  %s727 = scalar_lea.vmem [#allocation2], 215
  %v728 = vld [vmem:[%s727] ss:$2 sm:$0xff]
  %s729 = scalar_lea.vmem [#allocation2], 231
  %v730 = vld [vmem:[%s729] ss:$2 sm:$0xff]
  %s731 = scalar_lea.vmem [#allocation2], 247
  %v732 = vld [vmem:[%s731] ss:$2 sm:$0xff]
  %s733 = scalar_lea.vmem [#allocation2], 263
  %v734 = vld [vmem:[%s733] ss:$2 sm:$0xff]
  %s735 = scalar_lea.vmem [#allocation2], 295
  %v736 = vld [vmem:[%s735] ss:$2 sm:$0xff]
  %s737 = scalar_lea.vmem [#allocation2], 311
  %v738 = vld [vmem:[%s737] ss:$2 sm:$0xff]
  %s739 = scalar_lea.vmem [#allocation2], 327
  %v740 = vld [vmem:[%s739] ss:$2 sm:$0xff]
  %s741 = scalar_lea.vmem [#allocation2], 343
  %v742 = vld [vmem:[%s741] ss:$2 sm:$0xff]
  %s743 = scalar_lea.vmem [#allocation2], 359
  %v744 = vld [vmem:[%s743] ss:$2 sm:$0xff]
  %s745 = scalar_lea.vmem [#allocation2], 375
  %v746 = vld [vmem:[%s745] ss:$2 sm:$0xff]
  %s747 = scalar_lea.vmem [#allocation2], 391
  %v748 = vld [vmem:[%s747] ss:$2 sm:$0xff]
  %s749 = scalar_lea.vmem [#allocation2], 407
  %v750 = vld [vmem:[%s749] ss:$2 sm:$0xff]
  %s751 = scalar_lea.vmem [#allocation2], 439
  %v752 = vld [vmem:[%s751] ss:$2 sm:$0xff]
  %s753 = scalar_lea.vmem [#allocation2], 455
  %v754 = vld [vmem:[%s753] ss:$2 sm:$0xff]
  %s755 = scalar_lea.vmem [#allocation2], 471
  %v756 = vld [vmem:[%s755] ss:$2 sm:$0xff]
  %s757 = scalar_lea.vmem [#allocation2], 487
  %v758 = vld [vmem:[%s757] ss:$2 sm:$0xff]
  %s759 = scalar_lea.vmem [#allocation2], 503
  %v760 = vld [vmem:[%s759] ss:$2 sm:$0xff]
  %s761 = scalar_lea.vmem [#allocation2], 519
  %v762 = vld [vmem:[%s761] ss:$2 sm:$0xff]
  %s763 = scalar_lea.vmem [#allocation2], 535
  %v764 = vld [vmem:[%s763] ss:$2 sm:$0xff]
  %s765 = scalar_lea.vmem [#allocation2], 551
  %v766 = vld [vmem:[%s765] ss:$2 sm:$0xff]
  %s767 = scalar_lea.vmem [#allocation2], 8
  %v768 = vld [vmem:[%s767] ss:$2 sm:$0xff]
  %s769 = scalar_lea.vmem [#allocation2], 24
  %v770 = vld [vmem:[%s769] ss:$2 sm:$0xff]
  %s771 = scalar_lea.vmem [#allocation2], 40
  %v772 = vld [vmem:[%s771] ss:$2 sm:$0xff]
  %s773 = scalar_lea.vmem [#allocation2], 56
  %v774 = vld [vmem:[%s773] ss:$2 sm:$0xff]
  %s775 = scalar_lea.vmem [#allocation2], 72
  %v776 = vld [vmem:[%s775] ss:$2 sm:$0xff]
  %s777 = scalar_lea.vmem [#allocation2], 88
  %v778 = vld [vmem:[%s777] ss:$2 sm:$0xff]
  %s779 = scalar_lea.vmem [#allocation2], 104
  %v780 = vld [vmem:[%s779] ss:$2 sm:$0xff]
  %s781 = scalar_lea.vmem [#allocation2], 120
  %v782 = vld [vmem:[%s781] ss:$2 sm:$0xff]
  %s783 = scalar_lea.vmem [#allocation2], 152
  %v784 = vld [vmem:[%s783] ss:$2 sm:$0xff]
  %s785 = scalar_lea.vmem [#allocation2], 168
  %v786 = vld [vmem:[%s785] ss:$2 sm:$0xff]
  %s787 = scalar_lea.vmem [#allocation2], 184
  %v788 = vld [vmem:[%s787] ss:$2 sm:$0xff]
  %s789 = scalar_lea.vmem [#allocation2], 200
  %v790 = vld [vmem:[%s789] ss:$2 sm:$0xff]
  %s791 = scalar_lea.vmem [#allocation2], 216
  %v792 = vld [vmem:[%s791] ss:$2 sm:$0xff]
  %s793 = scalar_lea.vmem [#allocation2], 232
  %v794 = vld [vmem:[%s793] ss:$2 sm:$0xff]
  %s795 = scalar_lea.vmem [#allocation2], 248
  %v796 = vld [vmem:[%s795] ss:$2 sm:$0xff]
  %s797 = scalar_lea.vmem [#allocation2], 264
  %v798 = vld [vmem:[%s797] ss:$2 sm:$0xff]
  %s799 = scalar_lea.vmem [#allocation2], 296
  %v800 = vld [vmem:[%s799] ss:$2 sm:$0xff]
  %s801 = scalar_lea.vmem [#allocation2], 312
  %v802 = vld [vmem:[%s801] ss:$2 sm:$0xff]
  %s803 = scalar_lea.vmem [#allocation2], 328
  %v804 = vld [vmem:[%s803] ss:$2 sm:$0xff]
  %s805 = scalar_lea.vmem [#allocation2], 344
  %v806 = vld [vmem:[%s805] ss:$2 sm:$0xff]
  %s807 = scalar_lea.vmem [#allocation2], 360
  %v808 = vld [vmem:[%s807] ss:$2 sm:$0xff]
  %s809 = scalar_lea.vmem [#allocation2], 376
  %v810 = vld [vmem:[%s809] ss:$2 sm:$0xff]
  %s811 = scalar_lea.vmem [#allocation2], 392
  %v812 = vld [vmem:[%s811] ss:$2 sm:$0xff]
  %s813 = scalar_lea.vmem [#allocation2], 408
  %v814 = vld [vmem:[%s813] ss:$2 sm:$0xff]
  %s815 = scalar_lea.vmem [#allocation2], 440
  %v816 = vld [vmem:[%s815] ss:$2 sm:$0xff]
  %s817 = scalar_lea.vmem [#allocation2], 456
  %v818 = vld [vmem:[%s817] ss:$2 sm:$0xff]
  %s819 = scalar_lea.vmem [#allocation2], 472
  %v820 = vld [vmem:[%s819] ss:$2 sm:$0xff]
  %s821 = scalar_lea.vmem [#allocation2], 488
  %v822 = vld [vmem:[%s821] ss:$2 sm:$0xff]
  %s823 = scalar_lea.vmem [#allocation2], 504
  %v824 = vld [vmem:[%s823] ss:$2 sm:$0xff]
  %s825 = scalar_lea.vmem [#allocation2], 520
  %v826 = vld [vmem:[%s825] ss:$2 sm:$0xff]
  %s827 = scalar_lea.vmem [#allocation2], 536
  %v828 = vld [vmem:[%s827] ss:$2 sm:$0xff]
  %s829 = scalar_lea.vmem [#allocation2], 552
  %v830 = vld [vmem:[%s829] ss:$2 sm:$0xff]
  %s831 = scalar_lea.vmem [#allocation2], 9
  %v832 = vld [vmem:[%s831] ss:$2 sm:$0xff]
  %s833 = scalar_lea.vmem [#allocation2], 25
  %v834 = vld [vmem:[%s833] ss:$2 sm:$0xff]
  %s835 = scalar_lea.vmem [#allocation2], 41
  %v836 = vld [vmem:[%s835] ss:$2 sm:$0xff]
  %s837 = scalar_lea.vmem [#allocation2], 57
  %v838 = vld [vmem:[%s837] ss:$2 sm:$0xff]
  %s839 = scalar_lea.vmem [#allocation2], 73
  %v840 = vld [vmem:[%s839] ss:$2 sm:$0xff]
  %s841 = scalar_lea.vmem [#allocation2], 89
  %v842 = vld [vmem:[%s841] ss:$2 sm:$0xff]
  %s843 = scalar_lea.vmem [#allocation2], 105
  %v844 = vld [vmem:[%s843] ss:$2 sm:$0xff]
  %s845 = scalar_lea.vmem [#allocation2], 121
  %v846 = vld [vmem:[%s845] ss:$2 sm:$0xff]
  %s847 = scalar_lea.vmem [#allocation2], 153
  %v848 = vld [vmem:[%s847] ss:$2 sm:$0xff]
  %s849 = scalar_lea.vmem [#allocation2], 169
  %v850 = vld [vmem:[%s849] ss:$2 sm:$0xff]
  %s851 = scalar_lea.vmem [#allocation2], 185
  %v852 = vld [vmem:[%s851] ss:$2 sm:$0xff]
  %s853 = scalar_lea.vmem [#allocation2], 201
  %v854 = vld [vmem:[%s853] ss:$2 sm:$0xff]
  %s855 = scalar_lea.vmem [#allocation2], 217
  %v856 = vld [vmem:[%s855] ss:$2 sm:$0xff]
  %s857 = scalar_lea.vmem [#allocation2], 233
  %v858 = vld [vmem:[%s857] ss:$2 sm:$0xff]
  %s859 = scalar_lea.vmem [#allocation2], 249
  %v860 = vld [vmem:[%s859] ss:$2 sm:$0xff]
  %s861 = scalar_lea.vmem [#allocation2], 265
  %v862 = vld [vmem:[%s861] ss:$2 sm:$0xff]
  %s863 = scalar_lea.vmem [#allocation2], 297
  %v864 = vld [vmem:[%s863] ss:$2 sm:$0xff]
  %s865 = scalar_lea.vmem [#allocation2], 313
  %v866 = vld [vmem:[%s865] ss:$2 sm:$0xff]
  %s867 = scalar_lea.vmem [#allocation2], 329
  %v868 = vld [vmem:[%s867] ss:$2 sm:$0xff]
  %s869 = scalar_lea.vmem [#allocation2], 345
  %v870 = vld [vmem:[%s869] ss:$2 sm:$0xff]
  %s871 = scalar_lea.vmem [#allocation2], 361
  %v872 = vld [vmem:[%s871] ss:$2 sm:$0xff]
  %s873 = scalar_lea.vmem [#allocation2], 377
  %v874 = vld [vmem:[%s873] ss:$2 sm:$0xff]
  %s875 = scalar_lea.vmem [#allocation2], 393
  %v876 = vld [vmem:[%s875] ss:$2 sm:$0xff]
  %s877 = scalar_lea.vmem [#allocation2], 409
  %v878 = vld [vmem:[%s877] ss:$2 sm:$0xff]
  %s879 = scalar_lea.vmem [#allocation2], 441
  %v880 = vld [vmem:[%s879] ss:$2 sm:$0xff]
  %s881 = scalar_lea.vmem [#allocation2], 457
  %v882 = vld [vmem:[%s881] ss:$2 sm:$0xff]
  %s883 = scalar_lea.vmem [#allocation2], 473
  %v884 = vld [vmem:[%s883] ss:$2 sm:$0xff]
  %s885 = scalar_lea.vmem [#allocation2], 489
  %v886 = vld [vmem:[%s885] ss:$2 sm:$0xff]
  %s887 = scalar_lea.vmem [#allocation2], 505
  %v888 = vld [vmem:[%s887] ss:$2 sm:$0xff]
  %s889 = scalar_lea.vmem [#allocation2], 521
  %v890 = vld [vmem:[%s889] ss:$2 sm:$0xff]
  %s891 = scalar_lea.vmem [#allocation2], 537
  %v892 = vld [vmem:[%s891] ss:$2 sm:$0xff]
  %s893 = scalar_lea.vmem [#allocation2], 553
  %v894 = vld [vmem:[%s893] ss:$2 sm:$0xff]
  %s895 = scalar_lea.vmem [#allocation2], 10
  %v896 = vld [vmem:[%s895] ss:$2 sm:$0xff]
  %s897 = scalar_lea.vmem [#allocation2], 26
  %v898 = vld [vmem:[%s897] ss:$2 sm:$0xff]
  %s899 = scalar_lea.vmem [#allocation2], 42
  %v900 = vld [vmem:[%s899] ss:$2 sm:$0xff]
  %s901 = scalar_lea.vmem [#allocation2], 58
  %v902 = vld [vmem:[%s901] ss:$2 sm:$0xff]
  %s903 = scalar_lea.vmem [#allocation2], 74
  %v904 = vld [vmem:[%s903] ss:$2 sm:$0xff]
  %s905 = scalar_lea.vmem [#allocation2], 90
  %v906 = vld [vmem:[%s905] ss:$2 sm:$0xff]
  %s907 = scalar_lea.vmem [#allocation2], 106
  %v908 = vld [vmem:[%s907] ss:$2 sm:$0xff]
  %s909 = scalar_lea.vmem [#allocation2], 122
  %v910 = vld [vmem:[%s909] ss:$2 sm:$0xff]
  %s911 = scalar_lea.vmem [#allocation2], 154
  %v912 = vld [vmem:[%s911] ss:$2 sm:$0xff]
  %s913 = scalar_lea.vmem [#allocation2], 170
  %v914 = vld [vmem:[%s913] ss:$2 sm:$0xff]
  %s915 = scalar_lea.vmem [#allocation2], 186
  %v916 = vld [vmem:[%s915] ss:$2 sm:$0xff]
  %s917 = scalar_lea.vmem [#allocation2], 202
  %v918 = vld [vmem:[%s917] ss:$2 sm:$0xff]
  %s919 = scalar_lea.vmem [#allocation2], 218
  %v920 = vld [vmem:[%s919] ss:$2 sm:$0xff]
  %s921 = scalar_lea.vmem [#allocation2], 234
  %v922 = vld [vmem:[%s921] ss:$2 sm:$0xff]
  %s923 = scalar_lea.vmem [#allocation2], 250
  %v924 = vld [vmem:[%s923] ss:$2 sm:$0xff]
  %s925 = scalar_lea.vmem [#allocation2], 266
  %v926 = vld [vmem:[%s925] ss:$2 sm:$0xff]
  %s927 = scalar_lea.vmem [#allocation2], 298
  %v928 = vld [vmem:[%s927] ss:$2 sm:$0xff]
  %s929 = scalar_lea.vmem [#allocation2], 314
  %v930 = vld [vmem:[%s929] ss:$2 sm:$0xff]
  %s931 = scalar_lea.vmem [#allocation2], 330
  %v932 = vld [vmem:[%s931] ss:$2 sm:$0xff]
  %s933 = scalar_lea.vmem [#allocation2], 346
  %v934 = vld [vmem:[%s933] ss:$2 sm:$0xff]
  %s935 = scalar_lea.vmem [#allocation2], 362
  %v936 = vld [vmem:[%s935] ss:$2 sm:$0xff]
  %s937 = scalar_lea.vmem [#allocation2], 378
  %v938 = vld [vmem:[%s937] ss:$2 sm:$0xff]
  %s939 = scalar_lea.vmem [#allocation2], 394
  %v940 = vld [vmem:[%s939] ss:$2 sm:$0xff]
  %s941 = scalar_lea.vmem [#allocation2], 410
  %v942 = vld [vmem:[%s941] ss:$2 sm:$0xff]
  %s943 = scalar_lea.vmem [#allocation2], 442
  %v944 = vld [vmem:[%s943] ss:$2 sm:$0xff]
  %s945 = scalar_lea.vmem [#allocation2], 458
  %v946 = vld [vmem:[%s945] ss:$2 sm:$0xff]
  %s947 = scalar_lea.vmem [#allocation2], 474
  %v948 = vld [vmem:[%s947] ss:$2 sm:$0xff]
  %s949 = scalar_lea.vmem [#allocation2], 490
  %v950 = vld [vmem:[%s949] ss:$2 sm:$0xff]
  %s951 = scalar_lea.vmem [#allocation2], 506
  %v952 = vld [vmem:[%s951] ss:$2 sm:$0xff]
  %s953 = scalar_lea.vmem [#allocation2], 522
  %v954 = vld [vmem:[%s953] ss:$2 sm:$0xff]
  %s955 = scalar_lea.vmem [#allocation2], 538
  %v956 = vld [vmem:[%s955] ss:$2 sm:$0xff]
  %s957 = scalar_lea.vmem [#allocation2], 554
  %v958 = vld [vmem:[%s957] ss:$2 sm:$0xff]
  %991 = vrot.lane.b32.xlu0 %v704, 16
  %v992 = vpop.permute.xlu0 %991
  %993 = vrot.lane.b32.xlu0 %v706, 16
  %v994 = vpop.permute.xlu0 %993
  %995 = vrot.lane.b32.xlu0 %v708, 16
  %v996 = vpop.permute.xlu0 %995
  %997 = vrot.lane.b32.xlu0 %v710, 16
  %v998 = vpop.permute.xlu0 %997
  %999 = vrot.lane.b32.xlu0 %v712, 16
  %v1000 = vpop.permute.xlu0 %999
  %1001 = vrot.lane.b32.xlu0 %v714, 16
  %v1002 = vpop.permute.xlu0 %1001
  %1003 = vrot.lane.b32.xlu0 %v716, 16
  %v1004 = vpop.permute.xlu0 %1003
  %1005 = vrot.lane.b32.xlu0 %v718, 16
  %v1006 = vpop.permute.xlu0 %1005
  %1007 = vrot.lane.b32.xlu0 %v720, 16
  %v1008 = vpop.permute.xlu0 %1007
  %1009 = vrot.lane.b32.xlu0 %v722, 16
  %v1010 = vpop.permute.xlu0 %1009
  %1011 = vrot.lane.b32.xlu0 %v724, 16
  %v1012 = vpop.permute.xlu0 %1011
  %1013 = vrot.lane.b32.xlu0 %v726, 16
  %v1014 = vpop.permute.xlu0 %1013
  %1015 = vrot.lane.b32.xlu0 %v728, 16
  %v1016 = vpop.permute.xlu0 %1015
  %1017 = vrot.lane.b32.xlu0 %v730, 16
  %v1018 = vpop.permute.xlu0 %1017
  %1019 = vrot.lane.b32.xlu0 %v732, 16
  %v1020 = vpop.permute.xlu0 %1019
  %1021 = vrot.lane.b32.xlu0 %v734, 16
  %v1022 = vpop.permute.xlu0 %1021
  %1023 = vrot.lane.b32.xlu0 %v736, 16
  %v1024 = vpop.permute.xlu0 %1023
  %1025 = vrot.lane.b32.xlu0 %v738, 16
  %v1026 = vpop.permute.xlu0 %1025
  %1027 = vrot.lane.b32.xlu0 %v740, 16
  %v1028 = vpop.permute.xlu0 %1027
  %1029 = vrot.lane.b32.xlu0 %v742, 16
  %v1030 = vpop.permute.xlu0 %1029
  %1031 = vrot.lane.b32.xlu0 %v744, 16
  %v1032 = vpop.permute.xlu0 %1031
  %1033 = vrot.lane.b32.xlu0 %v746, 16
  %v1034 = vpop.permute.xlu0 %1033
  %1035 = vrot.lane.b32.xlu0 %v748, 16
  %v1036 = vpop.permute.xlu0 %1035
  %1037 = vrot.lane.b32.xlu0 %v750, 16
  %v1038 = vpop.permute.xlu0 %1037
  %1039 = vrot.lane.b32.xlu0 %v752, 16
  %v1040 = vpop.permute.xlu0 %1039
  %1041 = vrot.lane.b32.xlu0 %v754, 16
  %v1042 = vpop.permute.xlu0 %1041
  %1043 = vrot.lane.b32.xlu0 %v756, 16
  %v1044 = vpop.permute.xlu0 %1043
  %1045 = vrot.lane.b32.xlu0 %v758, 16
  %v1046 = vpop.permute.xlu0 %1045
  %1047 = vrot.lane.b32.xlu0 %v760, 16
  %v1048 = vpop.permute.xlu0 %1047
  %1049 = vrot.lane.b32.xlu0 %v762, 16
  %v1050 = vpop.permute.xlu0 %1049
  %1051 = vrot.lane.b32.xlu0 %v764, 16
  %v1052 = vpop.permute.xlu0 %1051
  %1053 = vrot.lane.b32.xlu0 %v766, 16
  %v1054 = vpop.permute.xlu0 %1053
  %1119 = vrot.lane.b32.xlu0 %v768, 32
  %v1120 = vpop.permute.xlu0 %1119
  %1121 = vrot.lane.b32.xlu0 %v770, 32
  %v1122 = vpop.permute.xlu0 %1121
  %1123 = vrot.lane.b32.xlu0 %v772, 32
  %v1124 = vpop.permute.xlu0 %1123
  %1125 = vrot.lane.b32.xlu0 %v774, 32
  %v1126 = vpop.permute.xlu0 %1125
  %1127 = vrot.lane.b32.xlu0 %v776, 32
  %v1128 = vpop.permute.xlu0 %1127
  %1129 = vrot.lane.b32.xlu0 %v778, 32
  %v1130 = vpop.permute.xlu0 %1129
  %1131 = vrot.lane.b32.xlu0 %v780, 32
  %v1132 = vpop.permute.xlu0 %1131
  %1133 = vrot.lane.b32.xlu0 %v782, 32
  %v1134 = vpop.permute.xlu0 %1133
  %1135 = vrot.lane.b32.xlu0 %v784, 32
  %v1136 = vpop.permute.xlu0 %1135
  %1137 = vrot.lane.b32.xlu0 %v786, 32
  %v1138 = vpop.permute.xlu0 %1137
  %1139 = vrot.lane.b32.xlu0 %v788, 32
  %v1140 = vpop.permute.xlu0 %1139
  %1141 = vrot.lane.b32.xlu0 %v790, 32
  %v1142 = vpop.permute.xlu0 %1141
  %1143 = vrot.lane.b32.xlu0 %v792, 32
  %v1144 = vpop.permute.xlu0 %1143
  %1145 = vrot.lane.b32.xlu0 %v794, 32
  %v1146 = vpop.permute.xlu0 %1145
  %1147 = vrot.lane.b32.xlu0 %v796, 32
  %v1148 = vpop.permute.xlu0 %1147
  %1149 = vrot.lane.b32.xlu0 %v798, 32
  %v1150 = vpop.permute.xlu0 %1149
  %1151 = vrot.lane.b32.xlu0 %v800, 32
  %v1152 = vpop.permute.xlu0 %1151
  %1153 = vrot.lane.b32.xlu0 %v802, 32
  %v1154 = vpop.permute.xlu0 %1153
  %1155 = vrot.lane.b32.xlu0 %v804, 32
  %v1156 = vpop.permute.xlu0 %1155
  %1157 = vrot.lane.b32.xlu0 %v806, 32
  %v1158 = vpop.permute.xlu0 %1157
  %1159 = vrot.lane.b32.xlu0 %v808, 32
  %v1160 = vpop.permute.xlu0 %1159
  %1161 = vrot.lane.b32.xlu0 %v810, 32
  %v1162 = vpop.permute.xlu0 %1161
  %1163 = vrot.lane.b32.xlu0 %v812, 32
  %v1164 = vpop.permute.xlu0 %1163
  %1165 = vrot.lane.b32.xlu0 %v814, 32
  %v1166 = vpop.permute.xlu0 %1165
  %1167 = vrot.lane.b32.xlu0 %v816, 32
  %v1168 = vpop.permute.xlu0 %1167
  %1169 = vrot.lane.b32.xlu0 %v818, 32
  %v1170 = vpop.permute.xlu0 %1169
  %1171 = vrot.lane.b32.xlu0 %v820, 32
  %v1172 = vpop.permute.xlu0 %1171
  %1173 = vrot.lane.b32.xlu0 %v822, 32
  %v1174 = vpop.permute.xlu0 %1173
  %1175 = vrot.lane.b32.xlu0 %v824, 32
  %v1176 = vpop.permute.xlu0 %1175
  %1177 = vrot.lane.b32.xlu0 %v826, 32
  %v1178 = vpop.permute.xlu0 %1177
  %1179 = vrot.lane.b32.xlu0 %v828, 32
  %v1180 = vpop.permute.xlu0 %1179
  %1181 = vrot.lane.b32.xlu0 %v830, 32
  %v1182 = vpop.permute.xlu0 %1181
  %1247 = vrot.lane.b32.xlu0 %v832, 48
  %v1248 = vpop.permute.xlu0 %1247
  %1249 = vrot.lane.b32.xlu0 %v834, 48
  %v1250 = vpop.permute.xlu0 %1249
  %1251 = vrot.lane.b32.xlu0 %v836, 48
  %v1252 = vpop.permute.xlu0 %1251
  %1253 = vrot.lane.b32.xlu0 %v838, 48
  %v1254 = vpop.permute.xlu0 %1253
  %1255 = vrot.lane.b32.xlu0 %v840, 48
  %v1256 = vpop.permute.xlu0 %1255
  %1257 = vrot.lane.b32.xlu0 %v842, 48
  %v1258 = vpop.permute.xlu0 %1257
  %1259 = vrot.lane.b32.xlu0 %v844, 48
  %v1260 = vpop.permute.xlu0 %1259
  %1261 = vrot.lane.b32.xlu0 %v846, 48
  %v1262 = vpop.permute.xlu0 %1261
  %1263 = vrot.lane.b32.xlu0 %v848, 48
  %v1264 = vpop.permute.xlu0 %1263
  %1265 = vrot.lane.b32.xlu0 %v850, 48
  %v1266 = vpop.permute.xlu0 %1265
  %1267 = vrot.lane.b32.xlu0 %v852, 48
  %v1268 = vpop.permute.xlu0 %1267
  %1269 = vrot.lane.b32.xlu0 %v854, 48
  %v1270 = vpop.permute.xlu0 %1269
  %1271 = vrot.lane.b32.xlu0 %v856, 48
  %v1272 = vpop.permute.xlu0 %1271
  %1273 = vrot.lane.b32.xlu0 %v858, 48
  %v1274 = vpop.permute.xlu0 %1273
  %1275 = vrot.lane.b32.xlu0 %v860, 48
  %v1276 = vpop.permute.xlu0 %1275
  %1277 = vrot.lane.b32.xlu0 %v862, 48
  %v1278 = vpop.permute.xlu0 %1277
  %1279 = vrot.lane.b32.xlu0 %v864, 48
  %v1280 = vpop.permute.xlu0 %1279
  %1281 = vrot.lane.b32.xlu0 %v866, 48
  %v1282 = vpop.permute.xlu0 %1281
  %1283 = vrot.lane.b32.xlu0 %v868, 48
  %v1284 = vpop.permute.xlu0 %1283
  %1285 = vrot.lane.b32.xlu0 %v870, 48
  %v1286 = vpop.permute.xlu0 %1285
  %1287 = vrot.lane.b32.xlu0 %v872, 48
  %v1288 = vpop.permute.xlu0 %1287
  %1289 = vrot.lane.b32.xlu0 %v874, 48
  %v1290 = vpop.permute.xlu0 %1289
  %1291 = vrot.lane.b32.xlu0 %v876, 48
  %v1292 = vpop.permute.xlu0 %1291
  %1293 = vrot.lane.b32.xlu0 %v878, 48
  %v1294 = vpop.permute.xlu0 %1293
  %1295 = vrot.lane.b32.xlu0 %v880, 48
  %v1296 = vpop.permute.xlu0 %1295
  %1297 = vrot.lane.b32.xlu0 %v882, 48
  %v1298 = vpop.permute.xlu0 %1297
  %1299 = vrot.lane.b32.xlu0 %v884, 48
  %v1300 = vpop.permute.xlu0 %1299
  %1301 = vrot.lane.b32.xlu0 %v886, 48
  %v1302 = vpop.permute.xlu0 %1301
  %1303 = vrot.lane.b32.xlu0 %v888, 48
  %v1304 = vpop.permute.xlu0 %1303
  %1305 = vrot.lane.b32.xlu0 %v890, 48
  %v1306 = vpop.permute.xlu0 %1305
  %1307 = vrot.lane.b32.xlu0 %v892, 48
  %v1308 = vpop.permute.xlu0 %1307
  %1309 = vrot.lane.b32.xlu0 %v894, 48
  %v1310 = vpop.permute.xlu0 %1309
  %1375 = vrot.lane.b32.xlu0 %v896, 64
  %v1376 = vpop.permute.xlu0 %1375
  %1377 = vrot.lane.b32.xlu0 %v898, 64
  %v1378 = vpop.permute.xlu0 %1377
  %1379 = vrot.lane.b32.xlu0 %v900, 64
  %v1380 = vpop.permute.xlu0 %1379
  %1381 = vrot.lane.b32.xlu0 %v902, 64
  %v1382 = vpop.permute.xlu0 %1381
  %1383 = vrot.lane.b32.xlu0 %v904, 64
  %v1384 = vpop.permute.xlu0 %1383
  %1385 = vrot.lane.b32.xlu0 %v906, 64
  %v1386 = vpop.permute.xlu0 %1385
  %1387 = vrot.lane.b32.xlu0 %v908, 64
  %v1388 = vpop.permute.xlu0 %1387
  %1389 = vrot.lane.b32.xlu0 %v910, 64
  %v1390 = vpop.permute.xlu0 %1389
  %1391 = vrot.lane.b32.xlu0 %v912, 64
  %v1392 = vpop.permute.xlu0 %1391
  %1393 = vrot.lane.b32.xlu0 %v914, 64
  %v1394 = vpop.permute.xlu0 %1393
  %1395 = vrot.lane.b32.xlu0 %v916, 64
  %v1396 = vpop.permute.xlu0 %1395
  %1397 = vrot.lane.b32.xlu0 %v918, 64
  %v1398 = vpop.permute.xlu0 %1397
  %1399 = vrot.lane.b32.xlu0 %v920, 64
  %v1400 = vpop.permute.xlu0 %1399
  %1401 = vrot.lane.b32.xlu0 %v922, 64
  %v1402 = vpop.permute.xlu0 %1401
  %1403 = vrot.lane.b32.xlu0 %v924, 64
  %v1404 = vpop.permute.xlu0 %1403
  %1405 = vrot.lane.b32.xlu0 %v926, 64
  %v1406 = vpop.permute.xlu0 %1405
  %1407 = vrot.lane.b32.xlu0 %v928, 64
  %v1408 = vpop.permute.xlu0 %1407
  %1409 = vrot.lane.b32.xlu0 %v930, 64
  %v1410 = vpop.permute.xlu0 %1409
  %1411 = vrot.lane.b32.xlu0 %v932, 64
  %v1412 = vpop.permute.xlu0 %1411
  %1413 = vrot.lane.b32.xlu0 %v934, 64
  %v1414 = vpop.permute.xlu0 %1413
  %1415 = vrot.lane.b32.xlu0 %v936, 64
  %v1416 = vpop.permute.xlu0 %1415
  %1417 = vrot.lane.b32.xlu0 %v938, 64
  %v1418 = vpop.permute.xlu0 %1417
  %1419 = vrot.lane.b32.xlu0 %v940, 64
  %v1420 = vpop.permute.xlu0 %1419
  %1421 = vrot.lane.b32.xlu0 %v942, 64
  %v1422 = vpop.permute.xlu0 %1421
  %1423 = vrot.lane.b32.xlu0 %v944, 64
  %v1424 = vpop.permute.xlu0 %1423
  %1425 = vrot.lane.b32.xlu0 %v946, 64
  %v1426 = vpop.permute.xlu0 %1425
  %1427 = vrot.lane.b32.xlu0 %v948, 64
  %v1428 = vpop.permute.xlu0 %1427
  %1429 = vrot.lane.b32.xlu0 %v950, 64
  %v1430 = vpop.permute.xlu0 %1429
  %1431 = vrot.lane.b32.xlu0 %v952, 64
  %v1432 = vpop.permute.xlu0 %1431
  %1433 = vrot.lane.b32.xlu0 %v954, 64
  %v1434 = vpop.permute.xlu0 %1433
  %1435 = vrot.lane.b32.xlu0 %v956, 64
  %v1436 = vpop.permute.xlu0 %1435
  %1437 = vrot.lane.b32.xlu0 %v958, 64
  %v1438 = vpop.permute.xlu0 %1437
  %v1471 = vsel %vm568, %v640, %v992
  %v1472 = vsel %vm568, %v642, %v994
  %v1473 = vsel %vm568, %v644, %v996
  %v1474 = vsel %vm568, %v646, %v998
  %v1475 = vsel %vm568, %v648, %v1000
  %v1476 = vsel %vm568, %v650, %v1002
  %v1477 = vsel %vm568, %v652, %v1004
  %v1478 = vsel %vm568, %v654, %v1006
  %v1479 = vsel %vm568, %v656, %v1008
  %v1480 = vsel %vm568, %v658, %v1010
  %v1481 = vsel %vm568, %v660, %v1012
  %v1482 = vsel %vm568, %v662, %v1014
  %v1483 = vsel %vm568, %v664, %v1016
  %v1484 = vsel %vm568, %v666, %v1018
  %v1485 = vsel %vm568, %v668, %v1020
  %v1486 = vsel %vm568, %v670, %v1022
  %v1487 = vsel %vm568, %v672, %v1024
  %v1488 = vsel %vm568, %v674, %v1026
  %v1489 = vsel %vm568, %v676, %v1028
  %v1490 = vsel %vm568, %v678, %v1030
  %v1491 = vsel %vm568, %v680, %v1032
  %v1492 = vsel %vm568, %v682, %v1034
  %v1493 = vsel %vm568, %v684, %v1036
  %v1494 = vsel %vm568, %v686, %v1038
  %v1495 = vsel %vm568, %v688, %v1040
  %v1496 = vsel %vm568, %v690, %v1042
  %v1497 = vsel %vm568, %v692, %v1044
  %v1498 = vsel %vm568, %v694, %v1046
  %v1499 = vsel %vm568, %v696, %v1048
  %v1500 = vsel %vm568, %v698, %v1050
  %v1501 = vsel %vm568, %v700, %v1052
  %v1502 = vsel %vm568, %v702, %v1054
  %vm1503 = vcmask 261120
  %v1504 = vsel %vm1503, %v1471, %v1120
  %v1505 = vsel %vm1503, %v1472, %v1122
  %v1506 = vsel %vm1503, %v1473, %v1124
  %v1507 = vsel %vm1503, %v1474, %v1126
  %v1508 = vsel %vm1503, %v1475, %v1128
  %v1509 = vsel %vm1503, %v1476, %v1130
  %v1510 = vsel %vm1503, %v1477, %v1132
  %v1511 = vsel %vm1503, %v1478, %v1134
  %v1512 = vsel %vm1503, %v1479, %v1136
  %v1513 = vsel %vm1503, %v1480, %v1138
  %v1514 = vsel %vm1503, %v1481, %v1140
  %v1515 = vsel %vm1503, %v1482, %v1142
  %v1516 = vsel %vm1503, %v1483, %v1144
  %v1517 = vsel %vm1503, %v1484, %v1146
  %v1518 = vsel %vm1503, %v1485, %v1148
  %v1519 = vsel %vm1503, %v1486, %v1150
  %v1520 = vsel %vm1503, %v1487, %v1152
  %v1521 = vsel %vm1503, %v1488, %v1154
  %v1522 = vsel %vm1503, %v1489, %v1156
  %v1523 = vsel %vm1503, %v1490, %v1158
  %v1524 = vsel %vm1503, %v1491, %v1160
  %v1525 = vsel %vm1503, %v1492, %v1162
  %v1526 = vsel %vm1503, %v1493, %v1164
  %v1527 = vsel %vm1503, %v1494, %v1166
  %v1528 = vsel %vm1503, %v1495, %v1168
  %v1529 = vsel %vm1503, %v1496, %v1170
  %v1530 = vsel %vm1503, %v1497, %v1172
  %v1531 = vsel %vm1503, %v1498, %v1174
  %v1532 = vsel %vm1503, %v1499, %v1176
  %v1533 = vsel %vm1503, %v1500, %v1178
  %v1534 = vsel %vm1503, %v1501, %v1180
  %v1535 = vsel %vm1503, %v1502, %v1182
  %vm1536 = vcmask 392192
  %v1537 = vsel %vm1536, %v1504, %v1248
  %v1538 = vsel %vm1536, %v1505, %v1250
  %v1539 = vsel %vm1536, %v1506, %v1252
  %v1540 = vsel %vm1536, %v1507, %v1254
  %v1541 = vsel %vm1536, %v1508, %v1256
  %v1542 = vsel %vm1536, %v1509, %v1258
  %v1543 = vsel %vm1536, %v1510, %v1260
  %v1544 = vsel %vm1536, %v1511, %v1262
  %v1545 = vsel %vm1536, %v1512, %v1264
  %v1546 = vsel %vm1536, %v1513, %v1266
  %v1547 = vsel %vm1536, %v1514, %v1268
  %v1548 = vsel %vm1536, %v1515, %v1270
  %v1549 = vsel %vm1536, %v1516, %v1272
  %v1550 = vsel %vm1536, %v1517, %v1274
  %v1551 = vsel %vm1536, %v1518, %v1276
  %v1552 = vsel %vm1536, %v1519, %v1278
  %v1553 = vsel %vm1536, %v1520, %v1280
  %v1554 = vsel %vm1536, %v1521, %v1282
  %v1555 = vsel %vm1536, %v1522, %v1284
  %v1556 = vsel %vm1536, %v1523, %v1286
  %v1557 = vsel %vm1536, %v1524, %v1288
  %v1558 = vsel %vm1536, %v1525, %v1290
  %v1559 = vsel %vm1536, %v1526, %v1292
  %v1560 = vsel %vm1536, %v1527, %v1294
  %v1561 = vsel %vm1536, %v1528, %v1296
  %v1562 = vsel %vm1536, %v1529, %v1298
  %v1563 = vsel %vm1536, %v1530, %v1300
  %v1564 = vsel %vm1536, %v1531, %v1302
  %v1565 = vsel %vm1536, %v1532, %v1304
  %v1566 = vsel %vm1536, %v1533, %v1306
  %v1567 = vsel %vm1536, %v1534, %v1308
  %v1568 = vsel %vm1536, %v1535, %v1310
  %vm1569 = vcmask 523264
  %v1570 = vsel %vm1569, %v1537, %v1376
  %v1571 = vsel %vm1569, %v1538, %v1378
  %v1572 = vsel %vm1569, %v1539, %v1380
  %v1573 = vsel %vm1569, %v1540, %v1382
  %v1574 = vsel %vm1569, %v1541, %v1384
  %v1575 = vsel %vm1569, %v1542, %v1386
  %v1576 = vsel %vm1569, %v1543, %v1388
  %v1577 = vsel %vm1569, %v1544, %v1390
  %v1578 = vsel %vm1569, %v1545, %v1392
  %v1579 = vsel %vm1569, %v1546, %v1394
  %v1580 = vsel %vm1569, %v1547, %v1396
  %v1581 = vsel %vm1569, %v1548, %v1398
  %v1582 = vsel %vm1569, %v1549, %v1400
  %v1583 = vsel %vm1569, %v1550, %v1402
  %v1584 = vsel %vm1569, %v1551, %v1404
  %v1585 = vsel %vm1569, %v1552, %v1406
  %v1586 = vsel %vm1569, %v1553, %v1408
  %v1587 = vsel %vm1569, %v1554, %v1410
  %v1588 = vsel %vm1569, %v1555, %v1412
  %v1589 = vsel %vm1569, %v1556, %v1414
  %v1590 = vsel %vm1569, %v1557, %v1416
  %v1591 = vsel %vm1569, %v1558, %v1418
  %v1592 = vsel %vm1569, %v1559, %v1420
  %v1593 = vsel %vm1569, %v1560, %v1422
  %v1594 = vsel %vm1569, %v1561, %v1424
  %v1595 = vsel %vm1569, %v1562, %v1426
  %v1596 = vsel %vm1569, %v1563, %v1428
  %v1597 = vsel %vm1569, %v1564, %v1430
  %v1598 = vsel %vm1569, %v1565, %v1432
  %v1599 = vsel %vm1569, %v1566, %v1434
  %v1600 = vsel %vm1569, %v1567, %v1436
  %v1601 = vsel %vm1569, %v1568, %v1438
  %v1602 = vld [vmem:[%s3] sm:$0xff]
  %v1603 = vld [vmem:[%s3 + $0x8] sm:$0xff]
  %v1604 = vld [vmem:[%s3 + $0x10] sm:$0xff]
  %v1605 = vld [vmem:[%s3 + $0x18] sm:$0xff]
  %v1606 = vld [vmem:[%s3 + $0x20] sm:$0xff]
  %v1607 = vld [vmem:[%s3 + $0x28] sm:$0xff]
  %v1608 = vld [vmem:[%s3 + $0x30] sm:$0xff]
  %v1609 = vld [vmem:[%s3 + $0x38] sm:$0xff]
  %v1610 = vld [vmem:[%s3 + $0x40] sm:$0xff]
  %v1611 = vld [vmem:[%s3 + $0x48] sm:$0xff]
  %v1612 = vld [vmem:[%s4] sm:$0x1]
  %v1614 = vperm.slane %v1612, 0
  %vm1616 = vcmask 654336
  %v1618 = vsel %vm1616, %v1570, 0
  %v1621 = vsel %vm1616, %v1571, 0
  %v1624 = vsel %vm1616, %v1572, 0
  %v1627 = vsel %vm1616, %v1573, 0
  %v1630 = vsel %vm1616, %v1574, 0
  %v1633 = vsel %vm1616, %v1575, 0
  %v1636 = vsel %vm1616, %v1576, 0
  %v1639 = vsel %vm1616, %v1577, 0
  %v1642 = vsel %vm1616, %v1578, 0
  %v1645 = vsel %vm1616, %v1579, 0
  %v1648 = vsel %vm1616, %v1580, 0
  %v1651 = vsel %vm1616, %v1581, 0
  %v1654 = vsel %vm1616, %v1582, 0
  %v1657 = vsel %vm1616, %v1583, 0
  %v1660 = vsel %vm1616, %v1584, 0
  %v1663 = vsel %vm1616, %v1585, 0
  %v1666 = vsel %vm1616, %v1586, 0
  %v1669 = vsel %vm1616, %v1587, 0
  %v1672 = vsel %vm1616, %v1588, 0
  %v1675 = vsel %vm1616, %v1589, 0
  %v1678 = vsel %vm1616, %v1590, 0
  %v1681 = vsel %vm1616, %v1591, 0
  %v1684 = vsel %vm1616, %v1592, 0
  %v1687 = vsel %vm1616, %v1593, 0
  %v1690 = vsel %vm1616, %v1594, 0
  %v1693 = vsel %vm1616, %v1595, 0
  %v1696 = vsel %vm1616, %v1596, 0
  %v1699 = vsel %vm1616, %v1597, 0
  %v1702 = vsel %vm1616, %v1598, 0
  %v1705 = vsel %vm1616, %v1599, 0
  %v1708 = vsel %vm1616, %v1600, 0
  %v1711 = vsel %vm1616, %v1601, 0
  %1713 = vmatpush.msra.mxu0 0.0
  %1714 = vmatpush.msra.mxu0 0.0
  %1715 = vmatpush.msra.mxu0 0.0
  %1716 = vmatpush.msra.mxu0 0.0
  %1717 = vmatpush.msra.mxu0 0.0
  %1718 = vmatpush.msra.mxu0 0.0
  %1719 = vmatpush.msra.mxu0 %v1611
  %1720 = vmatpush.msra.mxu0 %v1610
  %1721 = vmatpush.msra.mxu0 %v1609
  %1722 = vmatpush.msra.mxu0 %v1608
  %1723 = vmatpush.msra.mxu0 %v1607
  %1724 = vmatpush.msra.mxu0 %v1606
  %1725 = vmatpush.msra.mxu0 %v1605
  %1726 = vmatpush.msra.mxu0 %v1604
  %1727 = vmatpush.msra.mxu0 %v1603
  %1728 = vmatpush.msra.mxu0 %v1602
  %1729 = vmatmul.f32.gmra.mxu0 %v1618
  %v1730 = vpop.f32.mrf.mxu0
  %v1731 = vadd.f32 %v1614, %v1730
  %1732 = vmatmul.f32.gmra.mxu0 %v1621
  %v1733 = vpop.f32.mrf.mxu0
  %v1734 = vadd.f32 %v1614, %v1733
  %1735 = vmatmul.f32.gmra.mxu0 %v1624
  %v1736 = vpop.f32.mrf.mxu0
  %v1737 = vadd.f32 %v1614, %v1736
  %1738 = vmatmul.f32.gmra.mxu0 %v1627
  %v1739 = vpop.f32.mrf.mxu0
  %v1740 = vadd.f32 %v1614, %v1739
  %1741 = vmatmul.f32.gmra.mxu0 %v1630
  %v1742 = vpop.f32.mrf.mxu0
  %v1743 = vadd.f32 %v1614, %v1742
  %1744 = vmatmul.f32.gmra.mxu0 %v1633
  %v1745 = vpop.f32.mrf.mxu0
  %v1746 = vadd.f32 %v1614, %v1745
  %1747 = vmatmul.f32.gmra.mxu0 %v1636
  %v1748 = vpop.f32.mrf.mxu0
  %v1749 = vadd.f32 %v1614, %v1748
  %1750 = vmatmul.f32.gmra.mxu0 %v1639
  %v1751 = vpop.f32.mrf.mxu0
  %v1752 = vadd.f32 %v1614, %v1751
  %1753 = vmatmul.f32.gmra.mxu0 %v1642
  %v1754 = vpop.f32.mrf.mxu0
  %v1755 = vadd.f32 %v1614, %v1754
  %1756 = vmatmul.f32.gmra.mxu0 %v1645
  %v1757 = vpop.f32.mrf.mxu0
  %v1758 = vadd.f32 %v1614, %v1757
  %1759 = vmatmul.f32.gmra.mxu0 %v1648
  %v1760 = vpop.f32.mrf.mxu0
  %v1761 = vadd.f32 %v1614, %v1760
  %1762 = vmatmul.f32.gmra.mxu0 %v1651
  %v1763 = vpop.f32.mrf.mxu0
  %v1764 = vadd.f32 %v1614, %v1763
  %1765 = vmatmul.f32.gmra.mxu0 %v1654
  %v1766 = vpop.f32.mrf.mxu0
  %v1767 = vadd.f32 %v1614, %v1766
  %1768 = vmatmul.f32.gmra.mxu0 %v1657
  %v1769 = vpop.f32.mrf.mxu0
  %v1770 = vadd.f32 %v1614, %v1769
  %1771 = vmatmul.f32.gmra.mxu0 %v1660
  %v1772 = vpop.f32.mrf.mxu0
  %v1773 = vadd.f32 %v1614, %v1772
  %1774 = vmatmul.f32.gmra.mxu0 %v1663
  %v1775 = vpop.f32.mrf.mxu0
  %v1776 = vadd.f32 %v1614, %v1775
  %1777 = vmatmul.f32.gmra.mxu0 %v1666
  %v1778 = vpop.f32.mrf.mxu0
  %v1779 = vadd.f32 %v1614, %v1778
  %1780 = vmatmul.f32.gmra.mxu0 %v1669
  %v1781 = vpop.f32.mrf.mxu0
  %v1782 = vadd.f32 %v1614, %v1781
  %1783 = vmatmul.f32.gmra.mxu0 %v1672
  %v1784 = vpop.f32.mrf.mxu0
  %v1785 = vadd.f32 %v1614, %v1784
  %1786 = vmatmul.f32.gmra.mxu0 %v1675
  %v1787 = vpop.f32.mrf.mxu0
  %v1788 = vadd.f32 %v1614, %v1787
  %1789 = vmatmul.f32.gmra.mxu0 %v1678
  %v1790 = vpop.f32.mrf.mxu0
  %v1791 = vadd.f32 %v1614, %v1790
  %1792 = vmatmul.f32.gmra.mxu0 %v1681
  %v1793 = vpop.f32.mrf.mxu0
  %v1794 = vadd.f32 %v1614, %v1793
  %1795 = vmatmul.f32.gmra.mxu0 %v1684
  %v1796 = vpop.f32.mrf.mxu0
  %v1797 = vadd.f32 %v1614, %v1796
  %1798 = vmatmul.f32.gmra.mxu0 %v1687
  %v1799 = vpop.f32.mrf.mxu0
  %v1800 = vadd.f32 %v1614, %v1799
  %1801 = vmatmul.f32.gmra.mxu0 %v1690
  %v1802 = vpop.f32.mrf.mxu0
  %v1803 = vadd.f32 %v1614, %v1802
  %1804 = vmatmul.f32.gmra.mxu0 %v1693
  %v1805 = vpop.f32.mrf.mxu0
  %v1806 = vadd.f32 %v1614, %v1805
  %1807 = vmatmul.f32.gmra.mxu0 %v1696
  %v1808 = vpop.f32.mrf.mxu0
  %v1809 = vadd.f32 %v1614, %v1808
  %1810 = vmatmul.f32.gmra.mxu0 %v1699
  %v1811 = vpop.f32.mrf.mxu0
  %v1812 = vadd.f32 %v1614, %v1811
  %1813 = vmatmul.f32.gmra.mxu0 %v1702
  %v1814 = vpop.f32.mrf.mxu0
  %v1815 = vadd.f32 %v1614, %v1814
  %1816 = vmatmul.f32.gmra.mxu0 %v1705
  %v1817 = vpop.f32.mrf.mxu0
  %v1818 = vadd.f32 %v1614, %v1817
  %1819 = vmatmul.f32.gmra.mxu0 %v1708
  %v1820 = vpop.f32.mrf.mxu0
  %v1821 = vadd.f32 %v1614, %v1820
  %1822 = vmatmul.f32.gmra.mxu0 %v1711
  %v1823 = vpop.f32.mrf.mxu0
  %v1824 = vadd.f32 %v1614, %v1823
  %1825 = vdwg.mxu0
  %v1826 = vmax.f32 %v1731, 0.0
  %v1827 = vmax.f32 %v1734, 0.0
  %v1828 = vmax.f32 %v1737, 0.0
  %v1829 = vmax.f32 %v1740, 0.0
  %v1830 = vmax.f32 %v1743, 0.0
  %v1831 = vmax.f32 %v1746, 0.0
  %v1832 = vmax.f32 %v1749, 0.0
  %v1833 = vmax.f32 %v1752, 0.0
  %v1834 = vmax.f32 %v1755, 0.0
  %v1835 = vmax.f32 %v1758, 0.0
  %v1836 = vmax.f32 %v1761, 0.0
  %v1837 = vmax.f32 %v1764, 0.0
  %v1838 = vmax.f32 %v1767, 0.0
  %v1839 = vmax.f32 %v1770, 0.0
  %v1840 = vmax.f32 %v1773, 0.0
  %v1841 = vmax.f32 %v1776, 0.0
  %v1842 = vmax.f32 %v1779, 0.0
  %v1843 = vmax.f32 %v1782, 0.0
  %v1844 = vmax.f32 %v1785, 0.0
  %v1845 = vmax.f32 %v1788, 0.0
  %v1846 = vmax.f32 %v1791, 0.0
  %v1847 = vmax.f32 %v1794, 0.0
  %v1848 = vmax.f32 %v1797, 0.0
  %v1849 = vmax.f32 %v1800, 0.0
  %v1850 = vmax.f32 %v1803, 0.0
  %v1851 = vmax.f32 %v1806, 0.0
  %v1852 = vmax.f32 %v1809, 0.0
  %v1853 = vmax.f32 %v1812, 0.0
  %v1854 = vmax.f32 %v1815, 0.0
  %v1855 = vmax.f32 %v1818, 0.0
  %v1856 = vmax.f32 %v1821, 0.0
  %v1857 = vmax.f32 %v1824, 0.0
  %1858 = vst.msk [vmem:[#allocation3 + $0x6] sm:$0x3] %vm565, 0.0
  %1859 = vst.msk [vmem:[#allocation3 + $0x48] sm:$0x3] %vm565, 0.0
  %1860 = vst.msk [vmem:[#allocation3 + $0x8] sm:$0xff] %vm568, %v1826
  %1861 = vst.msk [vmem:[#allocation3 + $0x10] sm:$0xff] %vm568, %v1827
  %1862 = vst.msk [vmem:[#allocation3 + $0x18] sm:$0xff] %vm568, %v1828
  %1863 = vst.msk [vmem:[#allocation3 + $0x20] sm:$0xff] %vm568, %v1829
  %1864 = vst.msk [vmem:[#allocation3 + $0x28] sm:$0xff] %vm568, %v1830
  %1865 = vst.msk [vmem:[#allocation3 + $0x30] sm:$0xff] %vm568, %v1831
  %1866 = vst.msk [vmem:[#allocation3 + $0x38] sm:$0xff] %vm568, %v1832
  %1867 = vst.msk [vmem:[#allocation3 + $0x40] sm:$0xff] %vm568, %v1833
  %1868 = vst.msk [vmem:[#allocation3 + $0x56] sm:$0x3] %vm565, 0.0
  %1869 = vst.msk [vmem:[#allocation3 + $0x98] sm:$0x3] %vm565, 0.0
  %1870 = vst.msk [vmem:[#allocation3 + $0x58] sm:$0xff] %vm568, %v1834
  %1871 = vst.msk [vmem:[#allocation3 + $0x60] sm:$0xff] %vm568, %v1835
  %1872 = vst.msk [vmem:[#allocation3 + $0x68] sm:$0xff] %vm568, %v1836
  %1873 = vst.msk [vmem:[#allocation3 + $0x70] sm:$0xff] %vm568, %v1837
  %1874 = vst.msk [vmem:[#allocation3 + $0x78] sm:$0xff] %vm568, %v1838
  %1875 = vst.msk [vmem:[#allocation3 + $0x80] sm:$0xff] %vm568, %v1839
  %1876 = vst.msk [vmem:[#allocation3 + $0x88] sm:$0xff] %vm568, %v1840
  %1877 = vst.msk [vmem:[#allocation3 + $0x90] sm:$0xff] %vm568, %v1841
  %1878 = vst.msk [vmem:[#allocation3 + $0xa6] sm:$0x3] %vm565, 0.0
  %1879 = vst.msk [vmem:[#allocation3 + $0xe8] sm:$0x3] %vm565, 0.0
  %1880 = vst.msk [vmem:[#allocation3 + $0xa8] sm:$0xff] %vm568, %v1842
  %1881 = vst.msk [vmem:[#allocation3 + $0xb0] sm:$0xff] %vm568, %v1843
  %1882 = vst.msk [vmem:[#allocation3 + $0xb8] sm:$0xff] %vm568, %v1844
  %1883 = vst.msk [vmem:[#allocation3 + $0xc0] sm:$0xff] %vm568, %v1845
  %1884 = vst.msk [vmem:[#allocation3 + $0xc8] sm:$0xff] %vm568, %v1846
  %1885 = vst.msk [vmem:[#allocation3 + $0xd0] sm:$0xff] %vm568, %v1847
  %1886 = vst.msk [vmem:[#allocation3 + $0xd8] sm:$0xff] %vm568, %v1848
  %1887 = vst.msk [vmem:[#allocation3 + $0xe0] sm:$0xff] %vm568, %v1849
  %1888 = vst.msk [vmem:[#allocation3 + $0xf6] sm:$0x3] %vm565, 0.0
  %1889 = vst.msk [vmem:[#allocation3 + $0x138] sm:$0x3] %vm565, 0.0
  %1890 = vst.msk [vmem:[#allocation3 + $0xf8] sm:$0xff] %vm568, %v1850
  %1891 = vst.msk [vmem:[#allocation3 + $0x100] sm:$0xff] %vm568, %v1851
  %1892 = vst.msk [vmem:[#allocation3 + $0x108] sm:$0xff] %vm568, %v1852
  %1893 = vst.msk [vmem:[#allocation3 + $0x110] sm:$0xff] %vm568, %v1853
  %1894 = vst.msk [vmem:[#allocation3 + $0x118] sm:$0xff] %vm568, %v1854
  %1895 = vst.msk [vmem:[#allocation3 + $0x120] sm:$0xff] %vm568, %v1855
  %1896 = vst.msk [vmem:[#allocation3 + $0x128] sm:$0xff] %vm568, %v1856
  %1897 = vst.msk [vmem:[#allocation3 + $0x130] sm:$0xff] %vm568, %v1857
  %s1898 = scalar_lea.vmem [#allocation3], 6
  %v1899 = vld [vmem:[%s1898] ss:$2 sm:$0xff]
  %s1900 = scalar_lea.vmem [#allocation3], 22
  %v1901 = vld [vmem:[%s1900] ss:$2 sm:$0xff]
  %s1902 = scalar_lea.vmem [#allocation3], 38
  %v1903 = vld [vmem:[%s1902] ss:$2 sm:$0xff]
  %s1904 = scalar_lea.vmem [#allocation3], 54
  %v1905 = vld [vmem:[%s1904] ss:$2 sm:$0xff]
  %s1906 = scalar_lea.vmem [#allocation3], 86
  %v1907 = vld [vmem:[%s1906] ss:$2 sm:$0xff]
  %s1908 = scalar_lea.vmem [#allocation3], 102
  %v1909 = vld [vmem:[%s1908] ss:$2 sm:$0xff]
  %s1910 = scalar_lea.vmem [#allocation3], 118
  %v1911 = vld [vmem:[%s1910] ss:$2 sm:$0xff]
  %s1912 = scalar_lea.vmem [#allocation3], 134
  %v1913 = vld [vmem:[%s1912] ss:$2 sm:$0xff]
  %s1914 = scalar_lea.vmem [#allocation3], 166
  %v1915 = vld [vmem:[%s1914] ss:$2 sm:$0xff]
  %s1916 = scalar_lea.vmem [#allocation3], 182
  %v1917 = vld [vmem:[%s1916] ss:$2 sm:$0xff]
  %s1918 = scalar_lea.vmem [#allocation3], 198
  %v1919 = vld [vmem:[%s1918] ss:$2 sm:$0xff]
  %s1920 = scalar_lea.vmem [#allocation3], 214
  %v1921 = vld [vmem:[%s1920] ss:$2 sm:$0xff]
  %s1922 = scalar_lea.vmem [#allocation3], 246
  %v1923 = vld [vmem:[%s1922] ss:$2 sm:$0xff]
  %s1924 = scalar_lea.vmem [#allocation3], 262
  %v1925 = vld [vmem:[%s1924] ss:$2 sm:$0xff]
  %s1926 = scalar_lea.vmem [#allocation3], 278
  %v1927 = vld [vmem:[%s1926] ss:$2 sm:$0xff]
  %s1928 = scalar_lea.vmem [#allocation3], 294
  %v1929 = vld [vmem:[%s1928] ss:$2 sm:$0xff]
  %s1930 = scalar_lea.vmem [#allocation3], 7
  %v1931 = vld [vmem:[%s1930] ss:$2 sm:$0xff]
  %s1932 = scalar_lea.vmem [#allocation3], 23
  %v1933 = vld [vmem:[%s1932] ss:$2 sm:$0xff]
  %s1934 = scalar_lea.vmem [#allocation3], 39
  %v1935 = vld [vmem:[%s1934] ss:$2 sm:$0xff]
  %s1936 = scalar_lea.vmem [#allocation3], 55
  %v1937 = vld [vmem:[%s1936] ss:$2 sm:$0xff]
  %s1938 = scalar_lea.vmem [#allocation3], 87
  %v1939 = vld [vmem:[%s1938] ss:$2 sm:$0xff]
  %s1940 = scalar_lea.vmem [#allocation3], 103
  %v1941 = vld [vmem:[%s1940] ss:$2 sm:$0xff]
  %s1942 = scalar_lea.vmem [#allocation3], 119
  %v1943 = vld [vmem:[%s1942] ss:$2 sm:$0xff]
  %s1944 = scalar_lea.vmem [#allocation3], 135
  %v1945 = vld [vmem:[%s1944] ss:$2 sm:$0xff]
  %s1946 = scalar_lea.vmem [#allocation3], 167
  %v1947 = vld [vmem:[%s1946] ss:$2 sm:$0xff]
  %s1948 = scalar_lea.vmem [#allocation3], 183
  %v1949 = vld [vmem:[%s1948] ss:$2 sm:$0xff]
  %s1950 = scalar_lea.vmem [#allocation3], 199
  %v1951 = vld [vmem:[%s1950] ss:$2 sm:$0xff]
  %s1952 = scalar_lea.vmem [#allocation3], 215
  %v1953 = vld [vmem:[%s1952] ss:$2 sm:$0xff]
  %s1954 = scalar_lea.vmem [#allocation3], 247
  %v1955 = vld [vmem:[%s1954] ss:$2 sm:$0xff]
  %s1956 = scalar_lea.vmem [#allocation3], 263
  %v1957 = vld [vmem:[%s1956] ss:$2 sm:$0xff]
  %s1958 = scalar_lea.vmem [#allocation3], 279
  %v1959 = vld [vmem:[%s1958] ss:$2 sm:$0xff]
  %s1960 = scalar_lea.vmem [#allocation3], 295
  %v1961 = vld [vmem:[%s1960] ss:$2 sm:$0xff]
  %s1962 = scalar_lea.vmem [#allocation3], 8
  %v1963 = vld [vmem:[%s1962] ss:$2 sm:$0xff]
  %s1964 = scalar_lea.vmem [#allocation3], 24
  %v1965 = vld [vmem:[%s1964] ss:$2 sm:$0xff]
  %s1966 = scalar_lea.vmem [#allocation3], 40
  %v1967 = vld [vmem:[%s1966] ss:$2 sm:$0xff]
  %s1968 = scalar_lea.vmem [#allocation3], 56
  %v1969 = vld [vmem:[%s1968] ss:$2 sm:$0xff]
  %s1970 = scalar_lea.vmem [#allocation3], 88
  %v1971 = vld [vmem:[%s1970] ss:$2 sm:$0xff]
  %s1972 = scalar_lea.vmem [#allocation3], 104
  %v1973 = vld [vmem:[%s1972] ss:$2 sm:$0xff]
  %s1974 = scalar_lea.vmem [#allocation3], 120
  %v1975 = vld [vmem:[%s1974] ss:$2 sm:$0xff]
  %s1976 = scalar_lea.vmem [#allocation3], 136
  %v1977 = vld [vmem:[%s1976] ss:$2 sm:$0xff]
  %s1978 = scalar_lea.vmem [#allocation3], 168
  %v1979 = vld [vmem:[%s1978] ss:$2 sm:$0xff]
  %s1980 = scalar_lea.vmem [#allocation3], 184
  %v1981 = vld [vmem:[%s1980] ss:$2 sm:$0xff]
  %s1982 = scalar_lea.vmem [#allocation3], 200
  %v1983 = vld [vmem:[%s1982] ss:$2 sm:$0xff]
  %s1984 = scalar_lea.vmem [#allocation3], 216
  %v1985 = vld [vmem:[%s1984] ss:$2 sm:$0xff]
  %s1986 = scalar_lea.vmem [#allocation3], 248
  %v1987 = vld [vmem:[%s1986] ss:$2 sm:$0xff]
  %s1988 = scalar_lea.vmem [#allocation3], 264
  %v1989 = vld [vmem:[%s1988] ss:$2 sm:$0xff]
  %s1990 = scalar_lea.vmem [#allocation3], 280
  %v1991 = vld [vmem:[%s1990] ss:$2 sm:$0xff]
  %s1992 = scalar_lea.vmem [#allocation3], 296
  %v1993 = vld [vmem:[%s1992] ss:$2 sm:$0xff]
  %s1994 = scalar_lea.vmem [#allocation3], 9
  %v1995 = vld [vmem:[%s1994] ss:$2 sm:$0xff]
  %s1996 = scalar_lea.vmem [#allocation3], 25
  %v1997 = vld [vmem:[%s1996] ss:$2 sm:$0xff]
  %s1998 = scalar_lea.vmem [#allocation3], 41
  %v1999 = vld [vmem:[%s1998] ss:$2 sm:$0xff]
  %s2000 = scalar_lea.vmem [#allocation3], 57
  %v2001 = vld [vmem:[%s2000] ss:$2 sm:$0xff]
  %s2002 = scalar_lea.vmem [#allocation3], 89
  %v2003 = vld [vmem:[%s2002] ss:$2 sm:$0xff]
  %s2004 = scalar_lea.vmem [#allocation3], 105
  %v2005 = vld [vmem:[%s2004] ss:$2 sm:$0xff]
  %s2006 = scalar_lea.vmem [#allocation3], 121
  %v2007 = vld [vmem:[%s2006] ss:$2 sm:$0xff]
  %s2008 = scalar_lea.vmem [#allocation3], 137
  %v2009 = vld [vmem:[%s2008] ss:$2 sm:$0xff]
  %s2010 = scalar_lea.vmem [#allocation3], 169
  %v2011 = vld [vmem:[%s2010] ss:$2 sm:$0xff]
  %s2012 = scalar_lea.vmem [#allocation3], 185
  %v2013 = vld [vmem:[%s2012] ss:$2 sm:$0xff]
  %s2014 = scalar_lea.vmem [#allocation3], 201
  %v2015 = vld [vmem:[%s2014] ss:$2 sm:$0xff]
  %s2016 = scalar_lea.vmem [#allocation3], 217
  %v2017 = vld [vmem:[%s2016] ss:$2 sm:$0xff]
  %s2018 = scalar_lea.vmem [#allocation3], 249
  %v2019 = vld [vmem:[%s2018] ss:$2 sm:$0xff]
  %s2020 = scalar_lea.vmem [#allocation3], 265
  %v2021 = vld [vmem:[%s2020] ss:$2 sm:$0xff]
  %s2022 = scalar_lea.vmem [#allocation3], 281
  %v2023 = vld [vmem:[%s2022] ss:$2 sm:$0xff]
  %s2024 = scalar_lea.vmem [#allocation3], 297
  %v2025 = vld [vmem:[%s2024] ss:$2 sm:$0xff]
  %s2026 = scalar_lea.vmem [#allocation3], 10
  %v2027 = vld [vmem:[%s2026] ss:$2 sm:$0xff]
  %s2028 = scalar_lea.vmem [#allocation3], 26
  %v2029 = vld [vmem:[%s2028] ss:$2 sm:$0xff]
  %s2030 = scalar_lea.vmem [#allocation3], 42
  %v2031 = vld [vmem:[%s2030] ss:$2 sm:$0xff]
  %s2032 = scalar_lea.vmem [#allocation3], 58
  %v2033 = vld [vmem:[%s2032] ss:$2 sm:$0xff]
  %s2034 = scalar_lea.vmem [#allocation3], 90
  %v2035 = vld [vmem:[%s2034] ss:$2 sm:$0xff]
  %s2036 = scalar_lea.vmem [#allocation3], 106
  %v2037 = vld [vmem:[%s2036] ss:$2 sm:$0xff]
  %s2038 = scalar_lea.vmem [#allocation3], 122
  %v2039 = vld [vmem:[%s2038] ss:$2 sm:$0xff]
  %s2040 = scalar_lea.vmem [#allocation3], 138
  %v2041 = vld [vmem:[%s2040] ss:$2 sm:$0xff]
  %s2042 = scalar_lea.vmem [#allocation3], 170
  %v2043 = vld [vmem:[%s2042] ss:$2 sm:$0xff]
  %s2044 = scalar_lea.vmem [#allocation3], 186
  %v2045 = vld [vmem:[%s2044] ss:$2 sm:$0xff]
  %s2046 = scalar_lea.vmem [#allocation3], 202
  %v2047 = vld [vmem:[%s2046] ss:$2 sm:$0xff]
  %s2048 = scalar_lea.vmem [#allocation3], 218
  %v2049 = vld [vmem:[%s2048] ss:$2 sm:$0xff]
  %s2050 = scalar_lea.vmem [#allocation3], 250
  %v2051 = vld [vmem:[%s2050] ss:$2 sm:$0xff]
  %s2052 = scalar_lea.vmem [#allocation3], 266
  %v2053 = vld [vmem:[%s2052] ss:$2 sm:$0xff]
  %s2054 = scalar_lea.vmem [#allocation3], 282
  %v2055 = vld [vmem:[%s2054] ss:$2 sm:$0xff]
  %s2056 = scalar_lea.vmem [#allocation3], 298
  %v2057 = vld [vmem:[%s2056] ss:$2 sm:$0xff]
  %2074 = vrot.lane.b32.xlu0 %v1931, 16
  %v2075 = vpop.permute.xlu0 %2074
  %2076 = vrot.lane.b32.xlu0 %v1933, 16
  %v2077 = vpop.permute.xlu0 %2076
  %2078 = vrot.lane.b32.xlu0 %v1935, 16
  %v2079 = vpop.permute.xlu0 %2078
  %2080 = vrot.lane.b32.xlu0 %v1937, 16
  %v2081 = vpop.permute.xlu0 %2080
  %2082 = vrot.lane.b32.xlu0 %v1939, 16
  %v2083 = vpop.permute.xlu0 %2082
  %2084 = vrot.lane.b32.xlu0 %v1941, 16
  %v2085 = vpop.permute.xlu0 %2084
  %2086 = vrot.lane.b32.xlu0 %v1943, 16
  %v2087 = vpop.permute.xlu0 %2086
  %2088 = vrot.lane.b32.xlu0 %v1945, 16
  %v2089 = vpop.permute.xlu0 %2088
  %2090 = vrot.lane.b32.xlu0 %v1947, 16
  %v2091 = vpop.permute.xlu0 %2090
  %2092 = vrot.lane.b32.xlu0 %v1949, 16
  %v2093 = vpop.permute.xlu0 %2092
  %2094 = vrot.lane.b32.xlu0 %v1951, 16
  %v2095 = vpop.permute.xlu0 %2094
  %2096 = vrot.lane.b32.xlu0 %v1953, 16
  %v2097 = vpop.permute.xlu0 %2096
  %2098 = vrot.lane.b32.xlu0 %v1955, 16
  %v2099 = vpop.permute.xlu0 %2098
  %2100 = vrot.lane.b32.xlu0 %v1957, 16
  %v2101 = vpop.permute.xlu0 %2100
  %2102 = vrot.lane.b32.xlu0 %v1959, 16
  %v2103 = vpop.permute.xlu0 %2102
  %2104 = vrot.lane.b32.xlu0 %v1961, 16
  %v2105 = vpop.permute.xlu0 %2104
  %2138 = vrot.lane.b32.xlu0 %v1963, 32
  %v2139 = vpop.permute.xlu0 %2138
  %2140 = vrot.lane.b32.xlu0 %v1965, 32
  %v2141 = vpop.permute.xlu0 %2140
  %2142 = vrot.lane.b32.xlu0 %v1967, 32
  %v2143 = vpop.permute.xlu0 %2142
  %2144 = vrot.lane.b32.xlu0 %v1969, 32
  %v2145 = vpop.permute.xlu0 %2144
  %2146 = vrot.lane.b32.xlu0 %v1971, 32
  %v2147 = vpop.permute.xlu0 %2146
  %2148 = vrot.lane.b32.xlu0 %v1973, 32
  %v2149 = vpop.permute.xlu0 %2148
  %2150 = vrot.lane.b32.xlu0 %v1975, 32
  %v2151 = vpop.permute.xlu0 %2150
  %2152 = vrot.lane.b32.xlu0 %v1977, 32
  %v2153 = vpop.permute.xlu0 %2152
  %2154 = vrot.lane.b32.xlu0 %v1979, 32
  %v2155 = vpop.permute.xlu0 %2154
  %2156 = vrot.lane.b32.xlu0 %v1981, 32
  %v2157 = vpop.permute.xlu0 %2156
  %2158 = vrot.lane.b32.xlu0 %v1983, 32
  %v2159 = vpop.permute.xlu0 %2158
  %2160 = vrot.lane.b32.xlu0 %v1985, 32
  %v2161 = vpop.permute.xlu0 %2160
  %2162 = vrot.lane.b32.xlu0 %v1987, 32
  %v2163 = vpop.permute.xlu0 %2162
  %2164 = vrot.lane.b32.xlu0 %v1989, 32
  %v2165 = vpop.permute.xlu0 %2164
  %2166 = vrot.lane.b32.xlu0 %v1991, 32
  %v2167 = vpop.permute.xlu0 %2166
  %2168 = vrot.lane.b32.xlu0 %v1993, 32
  %v2169 = vpop.permute.xlu0 %2168
  %2202 = vrot.lane.b32.xlu0 %v1995, 48
  %v2203 = vpop.permute.xlu0 %2202
  %2204 = vrot.lane.b32.xlu0 %v1997, 48
  %v2205 = vpop.permute.xlu0 %2204
  %2206 = vrot.lane.b32.xlu0 %v1999, 48
  %v2207 = vpop.permute.xlu0 %2206
  %2208 = vrot.lane.b32.xlu0 %v2001, 48
  %v2209 = vpop.permute.xlu0 %2208
  %2210 = vrot.lane.b32.xlu0 %v2003, 48
  %v2211 = vpop.permute.xlu0 %2210
  %2212 = vrot.lane.b32.xlu0 %v2005, 48
  %v2213 = vpop.permute.xlu0 %2212
  %2214 = vrot.lane.b32.xlu0 %v2007, 48
  %v2215 = vpop.permute.xlu0 %2214
  %2216 = vrot.lane.b32.xlu0 %v2009, 48
  %v2217 = vpop.permute.xlu0 %2216
  %2218 = vrot.lane.b32.xlu0 %v2011, 48
  %v2219 = vpop.permute.xlu0 %2218
  %2220 = vrot.lane.b32.xlu0 %v2013, 48
  %v2221 = vpop.permute.xlu0 %2220
  %2222 = vrot.lane.b32.xlu0 %v2015, 48
  %v2223 = vpop.permute.xlu0 %2222
  %2224 = vrot.lane.b32.xlu0 %v2017, 48
  %v2225 = vpop.permute.xlu0 %2224
  %2226 = vrot.lane.b32.xlu0 %v2019, 48
  %v2227 = vpop.permute.xlu0 %2226
  %2228 = vrot.lane.b32.xlu0 %v2021, 48
  %v2229 = vpop.permute.xlu0 %2228
  %2230 = vrot.lane.b32.xlu0 %v2023, 48
  %v2231 = vpop.permute.xlu0 %2230
  %2232 = vrot.lane.b32.xlu0 %v2025, 48
  %v2233 = vpop.permute.xlu0 %2232
  %2266 = vrot.lane.b32.xlu0 %v2027, 64
  %v2267 = vpop.permute.xlu0 %2266
  %2268 = vrot.lane.b32.xlu0 %v2029, 64
  %v2269 = vpop.permute.xlu0 %2268
  %2270 = vrot.lane.b32.xlu0 %v2031, 64
  %v2271 = vpop.permute.xlu0 %2270
  %2272 = vrot.lane.b32.xlu0 %v2033, 64
  %v2273 = vpop.permute.xlu0 %2272
  %2274 = vrot.lane.b32.xlu0 %v2035, 64
  %v2275 = vpop.permute.xlu0 %2274
  %2276 = vrot.lane.b32.xlu0 %v2037, 64
  %v2277 = vpop.permute.xlu0 %2276
  %2278 = vrot.lane.b32.xlu0 %v2039, 64
  %v2279 = vpop.permute.xlu0 %2278
  %2280 = vrot.lane.b32.xlu0 %v2041, 64
  %v2281 = vpop.permute.xlu0 %2280
  %2282 = vrot.lane.b32.xlu0 %v2043, 64
  %v2283 = vpop.permute.xlu0 %2282
  %2284 = vrot.lane.b32.xlu0 %v2045, 64
  %v2285 = vpop.permute.xlu0 %2284
  %2286 = vrot.lane.b32.xlu0 %v2047, 64
  %v2287 = vpop.permute.xlu0 %2286
  %2288 = vrot.lane.b32.xlu0 %v2049, 64
  %v2289 = vpop.permute.xlu0 %2288
  %2290 = vrot.lane.b32.xlu0 %v2051, 64
  %v2291 = vpop.permute.xlu0 %2290
  %2292 = vrot.lane.b32.xlu0 %v2053, 64
  %v2293 = vpop.permute.xlu0 %2292
  %2294 = vrot.lane.b32.xlu0 %v2055, 64
  %v2295 = vpop.permute.xlu0 %2294
  %2296 = vrot.lane.b32.xlu0 %v2057, 64
  %v2297 = vpop.permute.xlu0 %2296
  %v2314 = vsel %vm568, %v1899, %v2075
  %v2315 = vsel %vm568, %v1901, %v2077
  %v2316 = vsel %vm568, %v1903, %v2079
  %v2317 = vsel %vm568, %v1905, %v2081
  %v2318 = vsel %vm568, %v1907, %v2083
  %v2319 = vsel %vm568, %v1909, %v2085
  %v2320 = vsel %vm568, %v1911, %v2087
  %v2321 = vsel %vm568, %v1913, %v2089
  %v2322 = vsel %vm568, %v1915, %v2091
  %v2323 = vsel %vm568, %v1917, %v2093
  %v2324 = vsel %vm568, %v1919, %v2095
  %v2325 = vsel %vm568, %v1921, %v2097
  %v2326 = vsel %vm568, %v1923, %v2099
  %v2327 = vsel %vm568, %v1925, %v2101
  %v2328 = vsel %vm568, %v1927, %v2103
  %v2329 = vsel %vm568, %v1929, %v2105
  %v2330 = vsel %vm1503, %v2314, %v2139
  %v2331 = vsel %vm1503, %v2315, %v2141
  %v2332 = vsel %vm1503, %v2316, %v2143
  %v2333 = vsel %vm1503, %v2317, %v2145
  %v2334 = vsel %vm1503, %v2318, %v2147
  %v2335 = vsel %vm1503, %v2319, %v2149
  %v2336 = vsel %vm1503, %v2320, %v2151
  %v2337 = vsel %vm1503, %v2321, %v2153
  %v2338 = vsel %vm1503, %v2322, %v2155
  %v2339 = vsel %vm1503, %v2323, %v2157
  %v2340 = vsel %vm1503, %v2324, %v2159
  %v2341 = vsel %vm1503, %v2325, %v2161
  %v2342 = vsel %vm1503, %v2326, %v2163
  %v2343 = vsel %vm1503, %v2327, %v2165
  %v2344 = vsel %vm1503, %v2328, %v2167
  %v2345 = vsel %vm1503, %v2329, %v2169
  %v2346 = vsel %vm1536, %v2330, %v2203
  %v2347 = vsel %vm1536, %v2331, %v2205
  %v2348 = vsel %vm1536, %v2332, %v2207
  %v2349 = vsel %vm1536, %v2333, %v2209
  %v2350 = vsel %vm1536, %v2334, %v2211
  %v2351 = vsel %vm1536, %v2335, %v2213
  %v2352 = vsel %vm1536, %v2336, %v2215
  %v2353 = vsel %vm1536, %v2337, %v2217
  %v2354 = vsel %vm1536, %v2338, %v2219
  %v2355 = vsel %vm1536, %v2339, %v2221
  %v2356 = vsel %vm1536, %v2340, %v2223
  %v2357 = vsel %vm1536, %v2341, %v2225
  %v2358 = vsel %vm1536, %v2342, %v2227
  %v2359 = vsel %vm1536, %v2343, %v2229
  %v2360 = vsel %vm1536, %v2344, %v2231
  %v2361 = vsel %vm1536, %v2345, %v2233
  %v2362 = vsel %vm1569, %v2346, %v2267
  %v2363 = vsel %vm1569, %v2347, %v2269
  %v2364 = vsel %vm1569, %v2348, %v2271
  %v2365 = vsel %vm1569, %v2349, %v2273
  %v2366 = vsel %vm1569, %v2350, %v2275
  %v2367 = vsel %vm1569, %v2351, %v2277
  %v2368 = vsel %vm1569, %v2352, %v2279
  %v2369 = vsel %vm1569, %v2353, %v2281
  %v2370 = vsel %vm1569, %v2354, %v2283
  %v2371 = vsel %vm1569, %v2355, %v2285
  %v2372 = vsel %vm1569, %v2356, %v2287
  %v2373 = vsel %vm1569, %v2357, %v2289
  %v2374 = vsel %vm1569, %v2358, %v2291
  %v2375 = vsel %vm1569, %v2359, %v2293
  %v2376 = vsel %vm1569, %v2360, %v2295
  %v2377 = vsel %vm1569, %v2361, %v2297
  %v2378 = vld [vmem:[%s5] sm:$0xff]
  %v2379 = vld [vmem:[%s5 + $0x8] sm:$0xff]
  %v2380 = vld [vmem:[%s5 + $0x10] sm:$0xff]
  %v2381 = vld [vmem:[%s5 + $0x18] sm:$0xff]
  %v2382 = vld [vmem:[%s5 + $0x20] sm:$0xff]
  %v2383 = vld [vmem:[%s5 + $0x28] sm:$0xff]
  %v2384 = vld [vmem:[%s5 + $0x30] sm:$0xff]
  %v2385 = vld [vmem:[%s5 + $0x38] sm:$0xff]
  %v2386 = vld [vmem:[%s5 + $0x40] sm:$0xff]
  %v2387 = vld [vmem:[%s5 + $0x48] sm:$0xff]
  %v2388 = vld [vmem:[%s6] sm:$0x1]
  %v2390 = vperm.slane %v2388, 0
  %v2393 = vsel %vm1616, %v2362, 0
  %v2396 = vsel %vm1616, %v2363, 0
  %v2399 = vsel %vm1616, %v2364, 0
  %v2402 = vsel %vm1616, %v2365, 0
  %v2405 = vsel %vm1616, %v2366, 0
  %v2408 = vsel %vm1616, %v2367, 0
  %v2411 = vsel %vm1616, %v2368, 0
  %v2414 = vsel %vm1616, %v2369, 0
  %v2417 = vsel %vm1616, %v2370, 0
  %v2420 = vsel %vm1616, %v2371, 0
  %v2423 = vsel %vm1616, %v2372, 0
  %v2426 = vsel %vm1616, %v2373, 0
  %v2429 = vsel %vm1616, %v2374, 0
  %v2432 = vsel %vm1616, %v2375, 0
  %v2435 = vsel %vm1616, %v2376, 0
  %v2438 = vsel %vm1616, %v2377, 0
  %2440 = vmatpush.msra.mxu0 0.0
  %2441 = vmatpush.msra.mxu0 0.0
  %2442 = vmatpush.msra.mxu0 0.0
  %2443 = vmatpush.msra.mxu0 0.0
  %2444 = vmatpush.msra.mxu0 0.0
  %2445 = vmatpush.msra.mxu0 0.0
  %2446 = vmatpush.msra.mxu0 %v2387
  %2447 = vmatpush.msra.mxu0 %v2386
  %2448 = vmatpush.msra.mxu0 %v2385
  %2449 = vmatpush.msra.mxu0 %v2384
  %2450 = vmatpush.msra.mxu0 %v2383
  %2451 = vmatpush.msra.mxu0 %v2382
  %2452 = vmatpush.msra.mxu0 %v2381
  %2453 = vmatpush.msra.mxu0 %v2380
  %2454 = vmatpush.msra.mxu0 %v2379
  %2455 = vmatpush.msra.mxu0 %v2378
  %2456 = vmatmul.f32.gmra.mxu0 %v2393
  %v2457 = vpop.f32.mrf.mxu0
  %v2458 = vadd.f32 %v2390, %v2457
  %2459 = vmatmul.f32.gmra.mxu0 %v2396
  %v2460 = vpop.f32.mrf.mxu0
  %v2461 = vadd.f32 %v2390, %v2460
  %2462 = vmatmul.f32.gmra.mxu0 %v2399
  %v2463 = vpop.f32.mrf.mxu0
  %v2464 = vadd.f32 %v2390, %v2463
  %2465 = vmatmul.f32.gmra.mxu0 %v2402
  %v2466 = vpop.f32.mrf.mxu0
  %v2467 = vadd.f32 %v2390, %v2466
  %2468 = vmatmul.f32.gmra.mxu0 %v2405
  %v2469 = vpop.f32.mrf.mxu0
  %v2470 = vadd.f32 %v2390, %v2469
  %2471 = vmatmul.f32.gmra.mxu0 %v2408
  %v2472 = vpop.f32.mrf.mxu0
  %v2473 = vadd.f32 %v2390, %v2472
  %2474 = vmatmul.f32.gmra.mxu0 %v2411
  %v2475 = vpop.f32.mrf.mxu0
  %v2476 = vadd.f32 %v2390, %v2475
  %2477 = vmatmul.f32.gmra.mxu0 %v2414
  %v2478 = vpop.f32.mrf.mxu0
  %v2479 = vadd.f32 %v2390, %v2478
  %2480 = vmatmul.f32.gmra.mxu0 %v2417
  %v2481 = vpop.f32.mrf.mxu0
  %v2482 = vadd.f32 %v2390, %v2481
  %2483 = vmatmul.f32.gmra.mxu0 %v2420
  %v2484 = vpop.f32.mrf.mxu0
  %v2485 = vadd.f32 %v2390, %v2484
  %2486 = vmatmul.f32.gmra.mxu0 %v2423
  %v2487 = vpop.f32.mrf.mxu0
  %v2488 = vadd.f32 %v2390, %v2487
  %2489 = vmatmul.f32.gmra.mxu0 %v2426
  %v2490 = vpop.f32.mrf.mxu0
  %v2491 = vadd.f32 %v2390, %v2490
  %2492 = vmatmul.f32.gmra.mxu0 %v2429
  %v2493 = vpop.f32.mrf.mxu0
  %v2494 = vadd.f32 %v2390, %v2493
  %2495 = vmatmul.f32.gmra.mxu0 %v2432
  %v2496 = vpop.f32.mrf.mxu0
  %v2497 = vadd.f32 %v2390, %v2496
  %2498 = vmatmul.f32.gmra.mxu0 %v2435
  %v2499 = vpop.f32.mrf.mxu0
  %v2500 = vadd.f32 %v2390, %v2499
  %2501 = vmatmul.f32.gmra.mxu0 %v2438
  %v2502 = vpop.f32.mrf.mxu0
  %v2503 = vadd.f32 %v2390, %v2502
  %2504 = vdwg.mxu0
  %v2505 = vmax.f32 %v2458, 0.0
  %v2506 = vmax.f32 %v2461, 0.0
  %v2507 = vmax.f32 %v2464, 0.0
  %v2508 = vmax.f32 %v2467, 0.0
  %v2509 = vmax.f32 %v2470, 0.0
  %v2510 = vmax.f32 %v2473, 0.0
  %v2511 = vmax.f32 %v2476, 0.0
  %v2512 = vmax.f32 %v2479, 0.0
  %v2513 = vmax.f32 %v2482, 0.0
  %v2514 = vmax.f32 %v2485, 0.0
  %v2515 = vmax.f32 %v2488, 0.0
  %v2516 = vmax.f32 %v2491, 0.0
  %v2517 = vmax.f32 %v2494, 0.0
  %v2518 = vmax.f32 %v2497, 0.0
  %v2519 = vmax.f32 %v2500, 0.0
  %v2520 = vmax.f32 %v2503, 0.0
  %2521 = vst.msk [vmem:[%s7] sm:$0xff] %vm568, %v2505
  %2522 = vst.msk [vmem:[%s7 + $0x8] sm:$0xff] %vm568, %v2506
  %2523 = vst.msk [vmem:[%s7 + $0x10] sm:$0xff] %vm568, %v2507
  %2524 = vst.msk [vmem:[%s7 + $0x18] sm:$0xff] %vm568, %v2508
  %2525 = vst.msk [vmem:[%s7 + $0x20] sm:$0xff] %vm568, %v2509
  %2526 = vst.msk [vmem:[%s7 + $0x28] sm:$0xff] %vm568, %v2510
  %2527 = vst.msk [vmem:[%s7 + $0x30] sm:$0xff] %vm568, %v2511
  %2528 = vst.msk [vmem:[%s7 + $0x38] sm:$0xff] %vm568, %v2512
  %2529 = vst.msk [vmem:[%s7 + $0x40] sm:$0xff] %vm568, %v2513
  %2530 = vst.msk [vmem:[%s7 + $0x48] sm:$0xff] %vm568, %v2514
  %2531 = vst.msk [vmem:[%s7 + $0x50] sm:$0xff] %vm568, %v2515
  %2532 = vst.msk [vmem:[%s7 + $0x58] sm:$0xff] %vm568, %v2516
  %2533 = vst.msk [vmem:[%s7 + $0x60] sm:$0xff] %vm568, %v2517
  %2534 = vst.msk [vmem:[%s7 + $0x68] sm:$0xff] %vm568, %v2518
  %2535 = vst.msk [vmem:[%s7 + $0x70] sm:$0xff] %vm568, %v2519
  %2536 = vst.msk [vmem:[%s7 + $0x78] sm:$0xff] %vm568, %v2520
  // Predicated region
  $region30: #{conv1d_encoder.2} parent=0 // pred_check
    _
  $region31: #{conv1d_encoder.2} parent=0 // pred_check_branch
    %2538 = sbr.rel (0) target = $region33
  $region32: #{conv1d_encoder.2} parent=0 // pred_region
    _
  $region33: #{conv1d_encoder.2} parent=0 // pred_fallthru
    _
  // Predicated region
  $region34: #{conv1d_encoder.2} parent=0 // pred_check
    _
  $region35: #{conv1d_encoder.2} parent=0 // pred_check_branch
    %2540 = sbr.rel (0) target = $region37
  $region36: #{conv1d_encoder.2} parent=0 // pred_region
    _
  $region37: #{conv1d_encoder.2} parent=0 // pred_fallthru
    _

</llo_original>
